<compile_context>
chip_gen: v6e
topology: v6e:2x2x1
jax: 0.10.0
libtpu: 0.0.40
codegen_flags: <defaults>
</compile_context>

<pallas_src>
import functools

import jax
import jax.numpy as jnp
from jax.experimental import pallas as pl
from jax.experimental.pallas import tpu as pltpu

_HI = jax.lax.Precision.HIGHEST   # keep the segmented-sum matmuls at full f32


# ---------------------------------------------------------------------------
# Kernels
# ---------------------------------------------------------------------------

def _layernorm_packed_kernel(x_ref, gamma_ref, beta_ref, seg_ref, segt_ref,
                             o_ref, *, eps, feat):
    """Lane-packed path: each physical row holds pack = 128 // feat logical rows.

    Per-logical-row sums are segmented reductions done as tiny matmuls with a
    (128, 128) 0/1 segment matrix, so the reductions and the per-row broadcast
    both ride the otherwise-idle MXU instead of the XLU, and all loads/stores
    stay lane-dense.
    """
    x = x_ref[...].astype(jnp.float32)                    # (tb, 128)
    seg = seg_ref[...]                                    # (128, 128): sum-by-segment
    segt = segt_ref[...]                                  # (128, 128): broadcast-by-segment

    # Pass 1: segmented mean.
    s1 = jnp.dot(x, seg, preferred_element_type=jnp.float32, precision=_HI)
    mean = s1 * (1.0 / feat)                              # (tb, 128) (cols >= pack are 0)
    mean_b = jnp.dot(mean, segt, preferred_element_type=jnp.float32, precision=_HI)

    # Pass 2: centered sum of squares (two-pass -> no cancellation).
    xc = x - mean_b
    ssq = jnp.dot(xc * xc, seg, preferred_element_type=jnp.float32, precision=_HI)
    std = jnp.sqrt(ssq * (1.0 / (feat - 1)))              # unbiased (ddof=1)

    # Guard denom==0 (only possible if eps == 0): keeps the phantom padded
    # segment columns (std == 0) from injecting inf*0 = NaN into the broadcast.
    denom = std + eps
    denom = jnp.where(denom > 0.0, denom, 1.0)
    inv = pl.reciprocal(denom, approx=False)              # (tb, 128)
    inv_b = jnp.dot(inv, segt, preferred_element_type=jnp.float32, precision=_HI)

    gamma = gamma_ref[...].astype(jnp.float32)            # (1, 128), gamma tiled pack x
    beta = beta_ref[...].astype(jnp.float32)
    o_ref[...] = (gamma * (xc * inv_b) + beta).astype(o_ref.dtype)


def _layernorm_kernel(x_ref, gamma_ref, beta_ref, o_ref, *, eps):
    """General path: one logical row per physical row (F >= 128, F not a
    divisor of 128, or row count not a multiple of the pack factor)."""
    x = x_ref[...].astype(jnp.float32)                    # (tb, F)
    n = x.shape[-1]

    mean = jnp.sum(x, axis=-1, keepdims=True) * (1.0 / n)
    xc = x - mean                                         # two-pass variance
    var = jnp.sum(xc * xc, axis=-1, keepdims=True) * (1.0 / (n - 1))
    std = jnp.sqrt(var)
    inv = pl.reciprocal(std + eps, approx=False)          # (tb, 1)

    gamma = gamma_ref[...].astype(jnp.float32)            # (1, F)
    beta = beta_ref[...].astype(jnp.float32)
    o_ref[...] = (gamma * (xc * inv) + beta).astype(o_ref.dtype)


# ---------------------------------------------------------------------------
# Tiling heuristics
# ---------------------------------------------------------------------------

def _cdiv(a, b):
    return (a + b - 1) // b


def _round_up(a, m):
    return _cdiv(a, m) * m


def _vmem_config():
    """(tile_budget_bytes, vmem_limit_bytes), derived from physical VMEM so the
    same heuristic fits v5e/v6e (128 MiB) and v7x (64 MiB)."""
    phys = 64 * 1024 * 1024  # assume the smallest (v7x) if we cannot query
    try:
        info = pltpu.get_tpu_info()
        phys = int(getattr(info, "vmem_capacity_bytes", phys))
    except Exception:
        pass
    tile_budget = min(24 * 1024 * 1024, phys // 4)
    vmem_limit = min(int(phys * 3 // 4), 2 * tile_budget + (8 << 20))
    return tile_budget, vmem_limit


def _evenize_grid(n_rows, block_rows):
    """Nudge block_rows (multiple of 8, never larger) so the 1-D grid has an
    even number of steps — keeps both v7x TensorCores busy on the 'parallel'
    axis. Best effort: keep the original tile if no clean option exists."""
    steps = _cdiv(n_rows, block_rows)
    if steps <= 1 or steps % 2 == 0:
        return block_rows
    for t in range(steps + 1, steps + 8, 2):          # try a few even counts
        lo = _round_up(_cdiv(n_rows, t), 8)
        hi = _cdiv(n_rows, t - 1) - 1                 # cdiv(n_rows, br) == t range
        if 8 <= lo <= hi and lo <= block_rows:
            return lo
    return block_rows


def _choose_block_rows(n_rows, feat, in_dtype, out_dtype, tile_budget,
                       max_rows=4096):
    in_b = jnp.dtype(in_dtype).itemsize
    out_b = jnp.dtype(out_dtype).itemsize
    # Double-buffered in/out tiles plus ~3 f32-wide in-kernel temporaries
    # (x upcast, centered x, y) per row of the tile.
    bytes_per_row = feat * (2 * (in_b + out_b) + 3 * 4)
    cap = max(8, tile_budget // bytes_per_row)
    block_rows = max(8, min(max_rows, (cap // 8) * 8))
    # Never allocate a tile (much) larger than the problem itself.
    block_rows = min(block_rows, _round_up(max(n_rows, 1), 8))
    return _evenize_grid(max(n_rows, 1), block_rows)


# ---------------------------------------------------------------------------
# Wrapper
# ---------------------------------------------------------------------------

def layer_norm(x, gamma, beta, *, eps=1e-6, block_rows=None):
    """LayerNorm over the last axis of x (any leading dims), module semantics."""
    orig_shape = x.shape
    feat = orig_shape[-1]
    assert feat >= 2, "unbiased std (ddof=1) needs at least 2 features"

    x2 = x.reshape(-1, feat)
    n_rows = x2.shape[0]
    out_dtype = x.dtype
    tile_budget, vmem_limit = _vmem_config()
    cparams = pltpu.CompilerParams(
        dimension_semantics=("parallel",),
        vmem_limit_bytes=vmem_limit,
    )

    pack = 128 // feat if (feat < 128 and 128 % feat == 0) else 1

    if pack > 1 and n_rows > 0 and n_rows % pack == 0:
        # ---- Lane-packed path (F < 128, e.g. the module's F = 32) ----------
        rows_p = n_rows // pack
        feat_p = feat * pack                     # == 128 (full lane width)
        xp = x2.reshape(rows_p, feat_p)          # contiguous -> free reshape
        gamma_p = jnp.tile(gamma.reshape(1, feat), (1, pack))
        beta_p = jnp.tile(beta.reshape(1, feat), (1, pack))

        # (128, 128) segment matrix: seg[j, g] = 1 iff lane j belongs to
        # logical row g of its physical row (columns >= pack are all zero).
        lane = jnp.arange(feat_p, dtype=jnp.int32)
        seg = (lane[:, None] // feat == lane[None, :]).astype(jnp.float32)
        segt = seg.T

        tb = block_rows or _choose_block_rows(rows_p, feat_p, x.dtype,
                                              out_dtype, tile_budget)
        grid = _cdiv(rows_p, tb)                 # Pallas masks the ragged tail

        out = pl.pallas_call(
            functools.partial(_layernorm_packed_kernel, eps=eps, feat=feat),
            out_shape=jax.ShapeDtypeStruct((rows_p, feat_p), out_dtype),
            grid_spec=pltpu.PrefetchScalarGridSpec(
                num_scalar_prefetch=0,
                grid=(grid,),
                in_specs=[
                    pl.BlockSpec((tb, feat_p), lambda i: (i, 0)),
                    pl.BlockSpec((1, feat_p), lambda i: (0, 0)),
                    pl.BlockSpec((1, feat_p), lambda i: (0, 0)),
                    pl.BlockSpec((feat_p, feat_p), lambda i: (0, 0)),
                    pl.BlockSpec((feat_p, feat_p), lambda i: (0, 0)),
                ],
                out_specs=pl.BlockSpec((tb, feat_p), lambda i: (i, 0)),
            ),
            compiler_params=cparams,
        )(xp, gamma_p, beta_p, seg, segt)
        return out.reshape(orig_shape)

    # ---- General path (F >= 128, F not dividing 128, or ragged rows) -------
    # TODO(synk): a ragged row count with tiny F falls back here (masked lane
    # stores); could be lane-packed too by splitting off the tail rows.
    gamma2 = gamma.reshape(1, feat)
    beta2 = beta.reshape(1, feat)
    tb = block_rows or _choose_block_rows(n_rows, feat, x.dtype, out_dtype,
                                          tile_budget)
    grid = _cdiv(max(n_rows, 1), tb)             # Pallas masks the ragged tail

    out = pl.pallas_call(
        functools.partial(_layernorm_kernel, eps=eps),
        out_shape=jax.ShapeDtypeStruct((n_rows, feat), out_dtype),
        grid_spec=pltpu.PrefetchScalarGridSpec(
            num_scalar_prefetch=0,
            grid=(grid,),
            in_specs=[
                pl.BlockSpec((tb, feat), lambda i: (i, 0)),
                pl.BlockSpec((1, feat), lambda i: (0, 0)),
                pl.BlockSpec((1, feat), lambda i: (0, 0)),
            ],
            out_specs=pl.BlockSpec((tb, feat), lambda i: (i, 0)),
        ),
        compiler_params=cparams,
    )(x2, gamma2, beta2)
    return out.reshape(orig_shape)


# ---------------------------------------------------------------------------
# Reference + test
# ---------------------------------------------------------------------------

def _reference(x, gamma, beta, eps):
    mean = jnp.mean(x, axis=-1, keepdims=True)
    std = jnp.std(x, axis=-1, keepdims=True, ddof=1)   # torch.std default: unbiased
    return gamma * (x - mean) / (std + eps) + beta


if __name__ == "__main__":
    key = jax.random.PRNGKey(0)
    eps = 1e-6
    k1, k2, k3 = jax.random.split(key, 3)

    # Matches the DDPG module's hidden width: features = 32.
    B, F = 8, 32
    x = jax.random.normal(k1, (B, F), dtype=jnp.float32)
    gamma = jnp.ones((F,), dtype=jnp.float32)    # nn.Parameter(torch.ones(F))
    beta = jnp.zeros((F,), dtype=jnp.float32)    # nn.Parameter(torch.zeros(F))

    out = jax.block_until_ready(layer_norm(x, gamma, beta, eps=eps))
    ref = _reference(x, gamma, beta, eps)
    assert jnp.allclose(out, ref, atol=1e-5, rtol=1e-5), "packed-path mismatch"

    # Ragged batch (not a multiple of the pack factor) -> general path, no pad.
    x2 = jax.random.normal(k2, (10, F), dtype=jnp.float32)
    out2 = jax.block_until_ready(layer_norm(x2, gamma, beta, eps=eps))
    ref2 = _reference(x2, gamma, beta, eps)
    assert jnp.allclose(out2, ref2, atol=1e-5, rtol=1e-5), "ragged mismatch"

    # Lane-dense wide-feature case with non-trivial affine params.
    F3 = 256
    x3 = jax.random.normal(k3, (2, 3, F3), dtype=jnp.float32)
    g3 = jax.random.normal(jax.random.PRNGKey(1), (F3,), dtype=jnp.float32)
    b3 = jax.random.normal(jax.random.PRNGKey(2), (F3,), dtype=jnp.float32)
    out3 = jax.block_until_ready(layer_norm(x3, g3, b3, eps=eps))
    ref3 = _reference(x3, g3, b3, eps)
    assert jnp.allclose(out3, ref3, atol=1e-5, rtol=1e-5), "wide-F mismatch"

    print("KERNEL_OK")
</pallas_src>

<mosaic_0001>
module attributes {stable_mosaic.version = 11 : i64} {
  func.func @_layernorm_packed_kernel(%arg0: i32, %arg1: memref<8x128xf32, #tpu.memory_space<vmem>>, %arg2: memref<1x128xf32, #tpu.memory_space<vmem>>, %arg3: memref<1x128xf32, #tpu.memory_space<vmem>>, %arg4: memref<128x128xf32, #tpu.memory_space<vmem>>, %arg5: memref<128x128xf32, #tpu.memory_space<vmem>>, %arg6: memref<8x128xf32, #tpu.memory_space<vmem>>) attributes {dimension_semantics = [#tpu.dimension_semantics<parallel>], iteration_bounds = array<i64: 1>, scalar_prefetch = 0 : i64, scratch_operands = 0 : i64, tpu.core_type = #tpu.core_type<tc>, window_params = [{transform_indices = @transform_0, window_bounds = array<i64: 8, 128>}, {pipeline_mode = #tpu.pipeline_mode<synchronous>, transform_indices = @transform_1, window_bounds = array<i64: 1, 128>}, {pipeline_mode = #tpu.pipeline_mode<synchronous>, transform_indices = @transform_2, window_bounds = array<i64: 1, 128>}, {pipeline_mode = #tpu.pipeline_mode<synchronous>, transform_indices = @transform_3, window_bounds = array<i64: 128, 128>}, {pipeline_mode = #tpu.pipeline_mode<synchronous>, transform_indices = @transform_4, window_bounds = array<i64: 128, 128>}, {transform_indices = @transform_5, window_bounds = array<i64: 8, 128>}]} {
    %c0 = arith.constant 0 : index
    %c0_0 = arith.constant 0 : index
    %0 = vector.load %arg1[%c0, %c0_0] : memref<8x128xf32, #tpu.memory_space<vmem>>, vector<8x128xf32>
    %c0_1 = arith.constant 0 : index
    %c0_2 = arith.constant 0 : index
    %1 = vector.load %arg4[%c0_1, %c0_2] : memref<128x128xf32, #tpu.memory_space<vmem>>, vector<128x128xf32>
    %c0_3 = arith.constant 0 : index
    %c0_4 = arith.constant 0 : index
    %2 = vector.load %arg5[%c0_3, %c0_4] : memref<128x128xf32, #tpu.memory_space<vmem>>, vector<128x128xf32>
    %cst = arith.constant dense<0.000000e+00> : vector<8x128xf32>
    %3 = tpu.matmul %0, %1, %cst {dimension_numbers = #tpu.dot_dimension_numbers<[1], [0], [0], [1], [0, 0, 1, 1], [], []>, precision = #tpu.contract_precision<fp32>} : vector<8x128xf32>, vector<128x128xf32>, vector<8x128xf32> -> vector<8x128xf32>
    %cst_5 = arith.constant 3.125000e-02 : f32
    %4 = vector.broadcast %cst_5 : f32 to vector<8x128xf32>
    %5 = arith.mulf %3, %4 : vector<8x128xf32>
    %cst_6 = arith.constant dense<0.000000e+00> : vector<8x128xf32>
    %6 = tpu.matmul %5, %2, %cst_6 {dimension_numbers = #tpu.dot_dimension_numbers<[1], [0], [0], [1], [0, 0, 1, 1], [], []>, precision = #tpu.contract_precision<fp32>} : vector<8x128xf32>, vector<128x128xf32>, vector<8x128xf32> -> vector<8x128xf32>
    %7 = arith.subf %0, %6 : vector<8x128xf32>
    %8 = arith.mulf %7, %7 : vector<8x128xf32>
    %cst_7 = arith.constant dense<0.000000e+00> : vector<8x128xf32>
    %9 = tpu.matmul %8, %1, %cst_7 {dimension_numbers = #tpu.dot_dimension_numbers<[1], [0], [0], [1], [0, 0, 1, 1], [], []>, precision = #tpu.contract_precision<fp32>} : vector<8x128xf32>, vector<128x128xf32>, vector<8x128xf32> -> vector<8x128xf32>
    %cst_8 = arith.constant 0.0322580636 : f32
    %10 = vector.broadcast %cst_8 : f32 to vector<8x128xf32>
    %11 = arith.mulf %9, %10 : vector<8x128xf32>
    %12 = math.sqrt %11 : vector<8x128xf32>
    %cst_9 = arith.constant 9.99999997E-7 : f32
    %13 = vector.broadcast %cst_9 : f32 to vector<8x128xf32>
    %14 = arith.addf %12, %13 : vector<8x128xf32>
    %cst_10 = arith.constant 0.000000e+00 : f32
    %15 = vector.broadcast %cst_10 : f32 to vector<8x128xf32>
    %16 = arith.cmpf ogt, %14, %15 : vector<8x128xf32>
    %cst_11 = arith.constant 1.000000e+00 : f32
    %17 = vector.broadcast %cst_11 : f32 to vector<8x128xf32>
    %18 = arith.select %16, %14, %17 : vector<8x128xi1>, vector<8x128xf32>
    %19 = tpu.reciprocal %18 : vector<8x128xf32> -> vector<8x128xf32>
    %cst_12 = arith.constant dense<0.000000e+00> : vector<8x128xf32>
    %20 = tpu.matmul %19, %2, %cst_12 {dimension_numbers = #tpu.dot_dimension_numbers<[1], [0], [0], [1], [0, 0, 1, 1], [], []>, precision = #tpu.contract_precision<fp32>} : vector<8x128xf32>, vector<128x128xf32>, vector<8x128xf32> -> vector<8x128xf32>
    %c0_13 = arith.constant 0 : index
    %c0_14 = arith.constant 0 : index
    %21 = vector.load %arg2[%c0_13, %c0_14] : memref<1x128xf32, #tpu.memory_space<vmem>>, vector<1x128xf32>
    %c0_15 = arith.constant 0 : index
    %c0_16 = arith.constant 0 : index
    %22 = vector.load %arg3[%c0_15, %c0_16] : memref<1x128xf32, #tpu.memory_space<vmem>>, vector<1x128xf32>
    %23 = arith.mulf %7, %20 : vector<8x128xf32>
    %24 = vector.broadcast %21 : vector<1x128xf32> to vector<8x128xf32>
    %25 = arith.mulf %24, %23 : vector<8x128xf32>
    %26 = vector.broadcast %22 : vector<1x128xf32> to vector<8x128xf32>
    %27 = arith.addf %25, %26 : vector<8x128xf32>
    %c0_17 = arith.constant 0 : index
    %c0_18 = arith.constant 0 : index
    %28 = vector.load %arg6[%c0_17, %c0_18] : memref<8x128xf32, #tpu.memory_space<vmem>>, vector<8x128xf32>
    tpu.vector_store %arg6[%c0_17, %c0_18], %27 {strides = array<i32>} : memref<8x128xf32, #tpu.memory_space<vmem>>, vector<8x128xf32>,
    return
  }
  func.func @transform_0(%arg0: i32) -> (i32, i32) {
    %c0_i32 = arith.constant 0 : i32
    %c0_i32_0 = arith.constant 0 : i32
    return %arg0, %c0_i32 : i32, i32
  }
  func.func @transform_1(%arg0: i32) -> (i32, i32) {
    %c0_i32 = arith.constant 0 : i32
    %c0_i32_0 = arith.constant 0 : i32
    %c0_i32_1 = arith.constant 0 : i32
    return %c0_i32, %c0_i32_0 : i32, i32
  }
  func.func @transform_2(%arg0: i32) -> (i32, i32) {
    %c0_i32 = arith.constant 0 : i32
    %c0_i32_0 = arith.constant 0 : i32
    %c0_i32_1 = arith.constant 0 : i32
    return %c0_i32, %c0_i32_0 : i32, i32
  }
  func.func @transform_3(%arg0: i32) -> (i32, i32) {
    %c0_i32 = arith.constant 0 : i32
    %c0_i32_0 = arith.constant 0 : i32
    %c0_i32_1 = arith.constant 0 : i32
    return %c0_i32, %c0_i32_0 : i32, i32
  }
  func.func @transform_4(%arg0: i32) -> (i32, i32) {
    %c0_i32 = arith.constant 0 : i32
    %c0_i32_0 = arith.constant 0 : i32
    %c0_i32_1 = arith.constant 0 : i32
    return %c0_i32, %c0_i32_0 : i32, i32
  }
  func.func @transform_5(%arg0: i32) -> (i32, i32) {
    %c0_i32 = arith.constant 0 : i32
    %c0_i32_0 = arith.constant 0 : i32
    return %arg0, %c0_i32 : i32, i32
  }
}

</mosaic_0001>

<llo_original>
// kernel: tpu_custom_call.1
$region0: #{tpu_custom_call.1}
  #allocation0 [shape = 'u32[]', space=smem, size = 0x4, offset = 0x4, fixed_abs, tag = 'smem constant byte address 0x4 - core index']
  #allocation1 [shape = 'u32[144,128]{1,0:T(1,128)}', space=vmem, size = 0x12000, scoped, tag = 'internal scratch']
  %s0 = inlined_call_operand.hbm [shape: f32[2,128], index: 0, kind: input, shape index: {}]
  %s1 = inlined_call_operand.vmem [shape: f32[1,128], index: 1, kind: input, shape index: {}]
  %s2 = inlined_call_operand.vmem [shape: f32[1,128], index: 2, kind: input, shape index: {}]
  %s3 = inlined_call_operand.hbm [shape: f32[128,128], index: 3, kind: input, shape index: {}]
  %s4 = inlined_call_operand.hbm [shape: f32[128,128], index: 4, kind: input, shape index: {}]
  %s5 = inlined_call_operand.hbm [shape: f32[2,128], index: 5, kind: output, shape index: {}]
  %s6 = sld [smem:[#allocation0]]
  $region42: #{tpu_custom_call.1} parent=0
    _
  %s8 = ssub.s32 1, %s6
  %s9 = scalar_select 0, %s8, %s6
  $region1: #{tpu_custom_call.1} parent=0
    #allocation2 [shape = 'u8[4096]{0}', space=vmem, size = 0x1000, scoped, tag = 'input window, operand 0, single buffered']
    #allocation3 [shape = 's32[1]{0}', space=sflag, size = 0x4, scoped, tag = 'scoped memory for tpu_custom_call.1']
    #allocation4 [shape = 's32[1]{0}', space=sflag, size = 0x4, scoped, tag = 'scoped memory for tpu_custom_call.1']
    #allocation5 [shape = 'u8[65536]{0}', space=vmem, size = 0x10000, scoped, tag = 'input window, operand 3, single buffered']
    #allocation6 [shape = 's32[1]{0}', space=sflag, size = 0x4, scoped, tag = 'scoped memory for tpu_custom_call.1']
    #allocation7 [shape = 'u8[65536]{0}', space=vmem, size = 0x10000, scoped, tag = 'input window, operand 4, single buffered']
    #allocation8 [shape = 'u8[4096]{0}', space=vmem, size = 0x1000, scoped, tag = 'output window, operand 0, single buffered']
    %10 = vsyncpa [#allocation3], 0
    %11 = vsyncpa [#allocation6], 0
    %12 = vsyncpa [#allocation4], 0
    // Predicated region
    $region2: #{tpu_custom_call.1} parent=1 // pred_check
      _
    $region3: #{tpu_custom_call.1} parent=1 // pred_check_branch
      %14 = sbr.rel (0) target = $region5
    $region4: #{tpu_custom_call.1} parent=1 // pred_region
      %s16 = ssub.s32 128, 32
      %17 = vsyncadd [#allocation3], %s16
      %s18 = sshll.u32 [#allocation2], 4
      %s19 = int_to_ptr.vmem [resolvable:$true] %s18
      %24 = dma.hbm_to_vmem [thread:$0]  %s0, 32, %s19, [#allocation3], 32, 32, 2
    $region5: #{tpu_custom_call.1} parent=1 // pred_fallthru
      _
    // Predicated region
    $region6: #{tpu_custom_call.1} parent=1 // pred_check
      _
    $region7: #{tpu_custom_call.1} parent=1 // pred_check_branch
      %26 = sbr.rel (0) target = $region9
    $region8: #{tpu_custom_call.1} parent=1 // pred_region
      _
    $region9: #{tpu_custom_call.1} parent=1 // pred_fallthru
      _
    // Predicated region
    $region10: #{tpu_custom_call.1} parent=1 // pred_check
      _
    $region11: #{tpu_custom_call.1} parent=1 // pred_check_branch
      %28 = sbr.rel (0) target = $region13
    $region12: #{tpu_custom_call.1} parent=1 // pred_region
      _
    $region13: #{tpu_custom_call.1} parent=1 // pred_fallthru
      _
    // Predicated region
    $region14: #{tpu_custom_call.1} parent=1 // pred_check
      _
    $region15: #{tpu_custom_call.1} parent=1 // pred_check_branch
      %30 = sbr.rel (0) target = $region17
    $region16: #{tpu_custom_call.1} parent=1 // pred_region
      %s32 = ssub.s32 2048, 2048
      %33 = vsyncadd [#allocation6], %s32
      %s34 = sshll.u32 [#allocation5], 4
      %s35 = int_to_ptr.vmem [resolvable:$true] %s34
      %40 = dma.hbm_to_vmem [thread:$0]  %s3, 2048, %s35, [#allocation6], 128, 128, 8
    $region17: #{tpu_custom_call.1} parent=1 // pred_fallthru
      _
    // Predicated region
    $region18: #{tpu_custom_call.1} parent=1 // pred_check
      _
    $region19: #{tpu_custom_call.1} parent=1 // pred_check_branch
      %42 = sbr.rel (0) target = $region21
    $region20: #{tpu_custom_call.1} parent=1 // pred_region
      %s44 = ssub.s32 2048, 2048
      %45 = vsyncadd [#allocation6], %s44
      %s46 = sshll.u32 [#allocation7], 4
      %s47 = int_to_ptr.vmem [resolvable:$true] %s46
      %52 = dma.hbm_to_vmem [thread:$0]  %s4, 2048, %s47, [#allocation6], 128, 128, 8
    $region21: #{tpu_custom_call.1} parent=1 // pred_fallthru
      _
    // Predicated region
    $region22: #{tpu_custom_call.1} parent=1 // pred_check
      _
    $region23: #{tpu_custom_call.1} parent=1 // pred_check_branch
      %54 = sbr.rel (0) target = $region25
    $region24: #{tpu_custom_call.1} parent=1 // pred_region
      %55 = dma.done [#allocation3], 128
    $region25: #{tpu_custom_call.1} parent=1 // pred_fallthru
      _
    // Predicated region
    $region26: #{tpu_custom_call.1} parent=1 // pred_check
      _
    $region27: #{tpu_custom_call.1} parent=1 // pred_check_branch
      %57 = sbr.rel (0) target = $region29
    $region28: #{tpu_custom_call.1} parent=1 // pred_region
      %58 = dma.done [#allocation6], 2048
    $region29: #{tpu_custom_call.1} parent=1 // pred_fallthru
      _
    // Predicated region
    $region30: #{tpu_custom_call.1} parent=1 // pred_check
      _
    $region31: #{tpu_custom_call.1} parent=1 // pred_check_branch
      %60 = sbr.rel (0) target = $region33
    $region32: #{tpu_custom_call.1} parent=1 // pred_region
      %61 = dma.done [#allocation6], 2048
    $region33: #{tpu_custom_call.1} parent=1 // pred_fallthru
      _
    %v62 = vld [vmem:[#allocation2] sm:$0xff]
    %v63 = vld [vmem:[#allocation5] sm:$0xff]
    %v64 = vld [vmem:[#allocation5 + $0x8] sm:$0xff]
    %v65 = vld [vmem:[#allocation5 + $0x10] sm:$0xff]
    %v66 = vld [vmem:[#allocation5 + $0x18] sm:$0xff]
    %v67 = vld [vmem:[#allocation5 + $0x20] sm:$0xff]
    %v68 = vld [vmem:[#allocation5 + $0x28] sm:$0xff]
    %v69 = vld [vmem:[#allocation5 + $0x30] sm:$0xff]
    %v70 = vld [vmem:[#allocation5 + $0x38] sm:$0xff]
    %v71 = vld [vmem:[#allocation5 + $0x40] sm:$0xff]
    %v72 = vld [vmem:[#allocation5 + $0x48] sm:$0xff]
    %v73 = vld [vmem:[#allocation5 + $0x50] sm:$0xff]
    %v74 = vld [vmem:[#allocation5 + $0x58] sm:$0xff]
    %v75 = vld [vmem:[#allocation5 + $0x60] sm:$0xff]
    %v76 = vld [vmem:[#allocation5 + $0x68] sm:$0xff]
    %v77 = vld [vmem:[#allocation5 + $0x70] sm:$0xff]
    %v78 = vld [vmem:[#allocation5 + $0x78] sm:$0xff]
    %v79 = vld [vmem:[#allocation7] sm:$0xff]
    %v80 = vld [vmem:[#allocation7 + $0x8] sm:$0xff]
    %v81 = vld [vmem:[#allocation7 + $0x10] sm:$0xff]
    %v82 = vld [vmem:[#allocation7 + $0x18] sm:$0xff]
    %v83 = vld [vmem:[#allocation7 + $0x20] sm:$0xff]
    %v84 = vld [vmem:[#allocation7 + $0x28] sm:$0xff]
    %v85 = vld [vmem:[#allocation7 + $0x30] sm:$0xff]
    %v86 = vld [vmem:[#allocation7 + $0x38] sm:$0xff]
    %v87 = vld [vmem:[#allocation7 + $0x40] sm:$0xff]
    %v88 = vld [vmem:[#allocation7 + $0x48] sm:$0xff]
    %v89 = vld [vmem:[#allocation7 + $0x50] sm:$0xff]
    %v90 = vld [vmem:[#allocation7 + $0x58] sm:$0xff]
    %v91 = vld [vmem:[#allocation7 + $0x60] sm:$0xff]
    %v92 = vld [vmem:[#allocation7 + $0x68] sm:$0xff]
    %v93 = vld [vmem:[#allocation7 + $0x70] sm:$0xff]
    %v94 = vld [vmem:[#allocation7 + $0x78] sm:$0xff]
    %95 = vmatprep.subr.mxu0 0.0
    %v96 = vand.u32 %v78, 4294901760
    %97 = vmatpush1.msra.mxu0 %v96
    %98 = vmatprep.subr.mxu0 0.0
    %v99 = vand.u32 %v77, 4294901760
    %100 = vmatpush1.msra.mxu0 %v99
    %101 = vmatprep.subr.mxu0 0.0
    %v102 = vand.u32 %v76, 4294901760
    %103 = vmatpush1.msra.mxu0 %v102
    %104 = vmatprep.subr.mxu0 0.0
    %v105 = vand.u32 %v75, 4294901760
    %106 = vmatpush1.msra.mxu0 %v105
    %107 = vmatprep.subr.mxu0 0.0
    %v108 = vand.u32 %v74, 4294901760
    %109 = vmatpush1.msra.mxu0 %v108
    %110 = vmatprep.subr.mxu0 0.0
    %v111 = vand.u32 %v73, 4294901760
    %112 = vmatpush1.msra.mxu0 %v111
    %113 = vmatprep.subr.mxu0 0.0
    %v114 = vand.u32 %v72, 4294901760
    %115 = vmatpush1.msra.mxu0 %v114
    %116 = vmatprep.subr.mxu0 0.0
    %v117 = vand.u32 %v71, 4294901760
    %118 = vmatpush1.msra.mxu0 %v117
    %119 = vmatprep.subr.mxu0 0.0
    %v120 = vand.u32 %v70, 4294901760
    %121 = vmatpush1.msra.mxu0 %v120
    %122 = vmatprep.subr.mxu0 0.0
    %v123 = vand.u32 %v69, 4294901760
    %124 = vmatpush1.msra.mxu0 %v123
    %125 = vmatprep.subr.mxu0 0.0
    %v126 = vand.u32 %v68, 4294901760
    %127 = vmatpush1.msra.mxu0 %v126
    %128 = vmatprep.subr.mxu0 0.0
    %v129 = vand.u32 %v67, 4294901760
    %130 = vmatpush1.msra.mxu0 %v129
    %131 = vmatprep.subr.mxu0 0.0
    %v132 = vand.u32 %v66, 4294901760
    %133 = vmatpush1.msra.mxu0 %v132
    %134 = vmatprep.subr.mxu0 0.0
    %v135 = vand.u32 %v65, 4294901760
    %136 = vmatpush1.msra.mxu0 %v135
    %137 = vmatprep.subr.mxu0 0.0
    %v138 = vand.u32 %v64, 4294901760
    %139 = vmatpush1.msra.mxu0 %v138
    %140 = vmatprep.subr.mxu0 0.0
    %v141 = vand.u32 %v63, 4294901760
    %142 = vmatpush1.msra.mxu0 %v141
    %143 = vmatprep.subr.mxu0 0.0
    %144 = vmatpush2.msra.mxu0 0.0
    %145 = vmatprep.subr.mxu0 0.0
    %146 = vmatpush2.msra.mxu0 0.0
    %147 = vmatprep.subr.mxu0 0.0
    %148 = vmatpush2.msra.mxu0 0.0
    %149 = vmatprep.subr.mxu0 0.0
    %150 = vmatpush2.msra.mxu0 0.0
    %151 = vmatprep.subr.mxu0 0.0
    %152 = vmatpush2.msra.mxu0 0.0
    %153 = vmatprep.subr.mxu0 0.0
    %154 = vmatpush2.msra.mxu0 0.0
    %155 = vmatprep.subr.mxu0 0.0
    %156 = vmatpush2.msra.mxu0 0.0
    %157 = vmatprep.subr.mxu0 0.0
    %158 = vmatpush2.msra.mxu0 0.0
    %159 = vmatprep.subr.mxu0 0.0
    %160 = vmatpush2.msra.mxu0 0.0
    %161 = vmatprep.subr.mxu0 0.0
    %162 = vmatpush2.msra.mxu0 0.0
    %163 = vmatprep.subr.mxu0 0.0
    %164 = vmatpush2.msra.mxu0 0.0
    %165 = vmatprep.subr.mxu0 0.0
    %166 = vmatpush2.msra.mxu0 0.0
    %167 = vmatprep.subr.mxu0 0.0
    %168 = vmatpush2.msra.mxu0 0.0
    %169 = vmatprep.subr.mxu0 0.0
    %170 = vmatpush2.msra.mxu0 0.0
    %171 = vmatprep.subr.mxu0 0.0
    %172 = vmatpush2.msra.mxu0 0.0
    %173 = vmatprep.subr.mxu0 0.0
    %174 = vmatpush2.msra.mxu0 0.0
    %175 = vmatprep.mubr.f32.mxu0 0.0
    %v176 = vand.u32 %v62, 4294901760
    %v177 = vsub.f32 %v62, %v176
    %v178 = vand.u32 %v177, 4294901760
    %v179 = vsub.f32 %v177, %v178
    %v180 = vand.u32 %v179, 4294901760
    %181 = vmatmul.mubr.f32.gmra.mxu0 %v180
    %v182 = vpop.f32.mrf.mxu0
    %v183 = vadd.f32 0.0, %v182
    %v184 = vpop.f32.mrf.mxu0
    %185 = vdwg.mxu0
    %186 = vmatprep.subr.mxu0 0.0
    %v187 = vand.u32 %v78, 4294901760
    %v188 = vsub.f32 %v78, %v187
    %v189 = vand.u32 %v188, 4294901760
    %v190 = vsub.f32 %v188, %v189
    %v191 = vand.u32 %v190, 4294901760
    %192 = vmatpush1.msra.mxu0 %v191
    %193 = vmatprep.subr.mxu0 0.0
    %v194 = vand.u32 %v77, 4294901760
    %v195 = vsub.f32 %v77, %v194
    %v196 = vand.u32 %v195, 4294901760
    %v197 = vsub.f32 %v195, %v196
    %v198 = vand.u32 %v197, 4294901760
    %199 = vmatpush1.msra.mxu0 %v198
    %200 = vmatprep.subr.mxu0 0.0
    %v201 = vand.u32 %v76, 4294901760
    %v202 = vsub.f32 %v76, %v201
    %v203 = vand.u32 %v202, 4294901760
    %v204 = vsub.f32 %v202, %v203
    %v205 = vand.u32 %v204, 4294901760
    %206 = vmatpush1.msra.mxu0 %v205
    %207 = vmatprep.subr.mxu0 0.0
    %v208 = vand.u32 %v75, 4294901760
    %v209 = vsub.f32 %v75, %v208
    %v210 = vand.u32 %v209, 4294901760
    %v211 = vsub.f32 %v209, %v210
    %v212 = vand.u32 %v211, 4294901760
    %213 = vmatpush1.msra.mxu0 %v212
    %214 = vmatprep.subr.mxu0 0.0
    %v215 = vand.u32 %v74, 4294901760
    %v216 = vsub.f32 %v74, %v215
    %v217 = vand.u32 %v216, 4294901760
    %v218 = vsub.f32 %v216, %v217
    %v219 = vand.u32 %v218, 4294901760
    %220 = vmatpush1.msra.mxu0 %v219
    %221 = vmatprep.subr.mxu0 0.0
    %v222 = vand.u32 %v73, 4294901760
    %v223 = vsub.f32 %v73, %v222
    %v224 = vand.u32 %v223, 4294901760
    %v225 = vsub.f32 %v223, %v224
    %v226 = vand.u32 %v225, 4294901760
    %227 = vmatpush1.msra.mxu0 %v226
    %228 = vmatprep.subr.mxu0 0.0
    %v229 = vand.u32 %v72, 4294901760
    %v230 = vsub.f32 %v72, %v229
    %v231 = vand.u32 %v230, 4294901760
    %v232 = vsub.f32 %v230, %v231
    %v233 = vand.u32 %v232, 4294901760
    %234 = vmatpush1.msra.mxu0 %v233
    %235 = vmatprep.subr.mxu0 0.0
    %v236 = vand.u32 %v71, 4294901760
    %v237 = vsub.f32 %v71, %v236
    %v238 = vand.u32 %v237, 4294901760
    %v239 = vsub.f32 %v237, %v238
    %v240 = vand.u32 %v239, 4294901760
    %241 = vmatpush1.msra.mxu0 %v240
    %242 = vmatprep.subr.mxu0 0.0
    %v243 = vand.u32 %v70, 4294901760
    %v244 = vsub.f32 %v70, %v243
    %v245 = vand.u32 %v244, 4294901760
    %v246 = vsub.f32 %v244, %v245
    %v247 = vand.u32 %v246, 4294901760
    %248 = vmatpush1.msra.mxu0 %v247
    %249 = vmatprep.subr.mxu0 0.0
    %v250 = vand.u32 %v69, 4294901760
    %v251 = vsub.f32 %v69, %v250
    %v252 = vand.u32 %v251, 4294901760
    %v253 = vsub.f32 %v251, %v252
    %v254 = vand.u32 %v253, 4294901760
    %255 = vmatpush1.msra.mxu0 %v254
    %256 = vmatprep.subr.mxu0 0.0
    %v257 = vand.u32 %v68, 4294901760
    %v258 = vsub.f32 %v68, %v257
    %v259 = vand.u32 %v258, 4294901760
    %v260 = vsub.f32 %v258, %v259
    %v261 = vand.u32 %v260, 4294901760
    %262 = vmatpush1.msra.mxu0 %v261
    %263 = vmatprep.subr.mxu0 0.0
    %v264 = vand.u32 %v67, 4294901760
    %v265 = vsub.f32 %v67, %v264
    %v266 = vand.u32 %v265, 4294901760
    %v267 = vsub.f32 %v265, %v266
    %v268 = vand.u32 %v267, 4294901760
    %269 = vmatpush1.msra.mxu0 %v268
    %270 = vmatprep.subr.mxu0 0.0
    %v271 = vand.u32 %v66, 4294901760
    %v272 = vsub.f32 %v66, %v271
    %v273 = vand.u32 %v272, 4294901760
    %v274 = vsub.f32 %v272, %v273
    %v275 = vand.u32 %v274, 4294901760
    %276 = vmatpush1.msra.mxu0 %v275
    %277 = vmatprep.subr.mxu0 0.0
    %v278 = vand.u32 %v65, 4294901760
    %v279 = vsub.f32 %v65, %v278
    %v280 = vand.u32 %v279, 4294901760
    %v281 = vsub.f32 %v279, %v280
    %v282 = vand.u32 %v281, 4294901760
    %283 = vmatpush1.msra.mxu0 %v282
    %284 = vmatprep.subr.mxu0 0.0
    %v285 = vand.u32 %v64, 4294901760
    %v286 = vsub.f32 %v64, %v285
    %v287 = vand.u32 %v286, 4294901760
    %v288 = vsub.f32 %v286, %v287
    %v289 = vand.u32 %v288, 4294901760
    %290 = vmatpush1.msra.mxu0 %v289
    %291 = vmatprep.subr.mxu0 0.0
    %v292 = vand.u32 %v63, 4294901760
    %v293 = vsub.f32 %v63, %v292
    %v294 = vand.u32 %v293, 4294901760
    %v295 = vsub.f32 %v293, %v294
    %v296 = vand.u32 %v295, 4294901760
    %297 = vmatpush1.msra.mxu0 %v296
    %298 = vmatprep.subr.mxu0 0.0
    %299 = vmatpush2.msra.mxu0 0.0
    %300 = vmatprep.subr.mxu0 0.0
    %301 = vmatpush2.msra.mxu0 0.0
    %302 = vmatprep.subr.mxu0 0.0
    %303 = vmatpush2.msra.mxu0 0.0
    %304 = vmatprep.subr.mxu0 0.0
    %305 = vmatpush2.msra.mxu0 0.0
    %306 = vmatprep.subr.mxu0 0.0
    %307 = vmatpush2.msra.mxu0 0.0
    %308 = vmatprep.subr.mxu0 0.0
    %309 = vmatpush2.msra.mxu0 0.0
    %310 = vmatprep.subr.mxu0 0.0
    %311 = vmatpush2.msra.mxu0 0.0
    %312 = vmatprep.subr.mxu0 0.0
    %313 = vmatpush2.msra.mxu0 0.0
    %314 = vmatprep.subr.mxu0 0.0
    %315 = vmatpush2.msra.mxu0 0.0
    %316 = vmatprep.subr.mxu0 0.0
    %317 = vmatpush2.msra.mxu0 0.0
    %318 = vmatprep.subr.mxu0 0.0
    %319 = vmatpush2.msra.mxu0 0.0
    %320 = vmatprep.subr.mxu0 0.0
    %321 = vmatpush2.msra.mxu0 0.0
    %322 = vmatprep.subr.mxu0 0.0
    %323 = vmatpush2.msra.mxu0 0.0
    %324 = vmatprep.subr.mxu0 0.0
    %325 = vmatpush2.msra.mxu0 0.0
    %326 = vmatprep.subr.mxu0 0.0
    %327 = vmatpush2.msra.mxu0 0.0
    %328 = vmatprep.subr.mxu0 0.0
    %329 = vmatpush2.msra.mxu0 0.0
    %330 = vmatprep.mubr.f32.mxu0 0.0
    %v331 = vand.u32 %v62, 4294901760
    %332 = vmatmul.mubr.f32.gmra.mxu0 %v331
    %v333 = vpop.f32.mrf.mxu0
    %v334 = vadd.f32 %v183, %v333
    %v335 = vpop.f32.mrf.mxu0
    %336 = vdwg.mxu0
    %337 = vmatprep.subr.mxu0 0.0
    %v338 = vand.u32 %v78, 4294901760
    %v339 = vsub.f32 %v78, %v338
    %340 = vmatpush1.msra.mxu0 %v339
    %341 = vmatprep.subr.mxu0 0.0
    %v342 = vand.u32 %v77, 4294901760
    %v343 = vsub.f32 %v77, %v342
    %344 = vmatpush1.msra.mxu0 %v343
    %345 = vmatprep.subr.mxu0 0.0
    %v346 = vand.u32 %v76, 4294901760
    %v347 = vsub.f32 %v76, %v346
    %348 = vmatpush1.msra.mxu0 %v347
    %349 = vmatprep.subr.mxu0 0.0
    %v350 = vand.u32 %v75, 4294901760
    %v351 = vsub.f32 %v75, %v350
    %352 = vmatpush1.msra.mxu0 %v351
    %353 = vmatprep.subr.mxu0 0.0
    %v354 = vand.u32 %v74, 4294901760
    %v355 = vsub.f32 %v74, %v354
    %356 = vmatpush1.msra.mxu0 %v355
    %357 = vmatprep.subr.mxu0 0.0
    %v358 = vand.u32 %v73, 4294901760
    %v359 = vsub.f32 %v73, %v358
    %360 = vmatpush1.msra.mxu0 %v359
    %361 = vmatprep.subr.mxu0 0.0
    %v362 = vand.u32 %v72, 4294901760
    %v363 = vsub.f32 %v72, %v362
    %364 = vmatpush1.msra.mxu0 %v363
    %365 = vmatprep.subr.mxu0 0.0
    %v366 = vand.u32 %v71, 4294901760
    %v367 = vsub.f32 %v71, %v366
    %368 = vmatpush1.msra.mxu0 %v367
    %369 = vmatprep.subr.mxu0 0.0
    %v370 = vand.u32 %v70, 4294901760
    %v371 = vsub.f32 %v70, %v370
    %372 = vmatpush1.msra.mxu0 %v371
    %373 = vmatprep.subr.mxu0 0.0
    %v374 = vand.u32 %v69, 4294901760
    %v375 = vsub.f32 %v69, %v374
    %376 = vmatpush1.msra.mxu0 %v375
    %377 = vmatprep.subr.mxu0 0.0
    %v378 = vand.u32 %v68, 4294901760
    %v379 = vsub.f32 %v68, %v378
    %380 = vmatpush1.msra.mxu0 %v379
    %381 = vmatprep.subr.mxu0 0.0
    %v382 = vand.u32 %v67, 4294901760
    %v383 = vsub.f32 %v67, %v382
    %384 = vmatpush1.msra.mxu0 %v383
    %385 = vmatprep.subr.mxu0 0.0
    %v386 = vand.u32 %v66, 4294901760
    %v387 = vsub.f32 %v66, %v386
    %388 = vmatpush1.msra.mxu0 %v387
    %389 = vmatprep.subr.mxu0 0.0
    %v390 = vand.u32 %v65, 4294901760
    %v391 = vsub.f32 %v65, %v390
    %392 = vmatpush1.msra.mxu0 %v391
    %393 = vmatprep.subr.mxu0 0.0
    %v394 = vand.u32 %v64, 4294901760
    %v395 = vsub.f32 %v64, %v394
    %396 = vmatpush1.msra.mxu0 %v395
    %397 = vmatprep.subr.mxu0 0.0
    %v398 = vand.u32 %v63, 4294901760
    %v399 = vsub.f32 %v63, %v398
    %400 = vmatpush1.msra.mxu0 %v399
    %401 = vmatprep.subr.mxu0 0.0
    %402 = vmatpush2.msra.mxu0 0.0
    %403 = vmatprep.subr.mxu0 0.0
    %404 = vmatpush2.msra.mxu0 0.0
    %405 = vmatprep.subr.mxu0 0.0
    %406 = vmatpush2.msra.mxu0 0.0
    %407 = vmatprep.subr.mxu0 0.0
    %408 = vmatpush2.msra.mxu0 0.0
    %409 = vmatprep.subr.mxu0 0.0
    %410 = vmatpush2.msra.mxu0 0.0
    %411 = vmatprep.subr.mxu0 0.0
    %412 = vmatpush2.msra.mxu0 0.0
    %413 = vmatprep.subr.mxu0 0.0
    %414 = vmatpush2.msra.mxu0 0.0
    %415 = vmatprep.subr.mxu0 0.0
    %416 = vmatpush2.msra.mxu0 0.0
    %417 = vmatprep.subr.mxu0 0.0
    %418 = vmatpush2.msra.mxu0 0.0
    %419 = vmatprep.subr.mxu0 0.0
    %420 = vmatpush2.msra.mxu0 0.0
    %421 = vmatprep.subr.mxu0 0.0
    %422 = vmatpush2.msra.mxu0 0.0
    %423 = vmatprep.subr.mxu0 0.0
    %424 = vmatpush2.msra.mxu0 0.0
    %425 = vmatprep.subr.mxu0 0.0
    %426 = vmatpush2.msra.mxu0 0.0
    %427 = vmatprep.subr.mxu0 0.0
    %428 = vmatpush2.msra.mxu0 0.0
    %429 = vmatprep.subr.mxu0 0.0
    %430 = vmatpush2.msra.mxu0 0.0
    %431 = vmatprep.subr.mxu0 0.0
    %432 = vmatpush2.msra.mxu0 0.0
    %433 = vmatprep.mubr.f32.mxu0 0.0
    %v434 = vand.u32 %v62, 4294901760
    %v435 = vsub.f32 %v62, %v434
    %436 = vmatmul.mubr.f32.gmra.mxu0 %v435
    %v437 = vpop.f32.mrf.mxu0
    %v438 = vadd.f32 %v334, %v437
    %v439 = vpop.f32.mrf.mxu0
    %440 = vdwg.mxu0
    %441 = vmatprep.subr.mxu0 0.0
    %v442 = vand.u32 %v78, 4294901760
    %443 = vmatpush1.msra.mxu0 %v442
    %444 = vmatprep.subr.mxu0 0.0
    %v445 = vand.u32 %v77, 4294901760
    %446 = vmatpush1.msra.mxu0 %v445
    %447 = vmatprep.subr.mxu0 0.0
    %v448 = vand.u32 %v76, 4294901760
    %449 = vmatpush1.msra.mxu0 %v448
    %450 = vmatprep.subr.mxu0 0.0
    %v451 = vand.u32 %v75, 4294901760
    %452 = vmatpush1.msra.mxu0 %v451
    %453 = vmatprep.subr.mxu0 0.0
    %v454 = vand.u32 %v74, 4294901760
    %455 = vmatpush1.msra.mxu0 %v454
    %456 = vmatprep.subr.mxu0 0.0
    %v457 = vand.u32 %v73, 4294901760
    %458 = vmatpush1.msra.mxu0 %v457
    %459 = vmatprep.subr.mxu0 0.0
    %v460 = vand.u32 %v72, 4294901760
    %461 = vmatpush1.msra.mxu0 %v460
    %462 = vmatprep.subr.mxu0 0.0
    %v463 = vand.u32 %v71, 4294901760
    %464 = vmatpush1.msra.mxu0 %v463
    %465 = vmatprep.subr.mxu0 0.0
    %v466 = vand.u32 %v70, 4294901760
    %467 = vmatpush1.msra.mxu0 %v466
    %468 = vmatprep.subr.mxu0 0.0
    %v469 = vand.u32 %v69, 4294901760
    %470 = vmatpush1.msra.mxu0 %v469
    %471 = vmatprep.subr.mxu0 0.0
    %v472 = vand.u32 %v68, 4294901760
    %473 = vmatpush1.msra.mxu0 %v472
    %474 = vmatprep.subr.mxu0 0.0
    %v475 = vand.u32 %v67, 4294901760
    %476 = vmatpush1.msra.mxu0 %v475
    %477 = vmatprep.subr.mxu0 0.0
    %v478 = vand.u32 %v66, 4294901760
    %479 = vmatpush1.msra.mxu0 %v478
    %480 = vmatprep.subr.mxu0 0.0
    %v481 = vand.u32 %v65, 4294901760
    %482 = vmatpush1.msra.mxu0 %v481
    %483 = vmatprep.subr.mxu0 0.0
    %v484 = vand.u32 %v64, 4294901760
    %485 = vmatpush1.msra.mxu0 %v484
    %486 = vmatprep.subr.mxu0 0.0
    %v487 = vand.u32 %v63, 4294901760
    %488 = vmatpush1.msra.mxu0 %v487
    %489 = vmatprep.subr.mxu0 0.0
    %490 = vmatpush2.msra.mxu0 0.0
    %491 = vmatprep.subr.mxu0 0.0
    %492 = vmatpush2.msra.mxu0 0.0
    %493 = vmatprep.subr.mxu0 0.0
    %494 = vmatpush2.msra.mxu0 0.0
    %495 = vmatprep.subr.mxu0 0.0
    %496 = vmatpush2.msra.mxu0 0.0
    %497 = vmatprep.subr.mxu0 0.0
    %498 = vmatpush2.msra.mxu0 0.0
    %499 = vmatprep.subr.mxu0 0.0
    %500 = vmatpush2.msra.mxu0 0.0
    %501 = vmatprep.subr.mxu0 0.0
    %502 = vmatpush2.msra.mxu0 0.0
    %503 = vmatprep.subr.mxu0 0.0
    %504 = vmatpush2.msra.mxu0 0.0
    %505 = vmatprep.subr.mxu0 0.0
    %506 = vmatpush2.msra.mxu0 0.0
    %507 = vmatprep.subr.mxu0 0.0
    %508 = vmatpush2.msra.mxu0 0.0
    %509 = vmatprep.subr.mxu0 0.0
    %510 = vmatpush2.msra.mxu0 0.0
    %511 = vmatprep.subr.mxu0 0.0
    %512 = vmatpush2.msra.mxu0 0.0
    %513 = vmatprep.subr.mxu0 0.0
    %514 = vmatpush2.msra.mxu0 0.0
    %515 = vmatprep.subr.mxu0 0.0
    %516 = vmatpush2.msra.mxu0 0.0
    %517 = vmatprep.subr.mxu0 0.0
    %518 = vmatpush2.msra.mxu0 0.0
    %519 = vmatprep.subr.mxu0 0.0
    %520 = vmatpush2.msra.mxu0 0.0
    %521 = vmatprep.mubr.f32.mxu0 0.0
    %v522 = vand.u32 %v62, 4294901760
    %v523 = vsub.f32 %v62, %v522
    %v524 = vand.u32 %v523, 4294901760
    %525 = vmatmul.mubr.f32.gmra.mxu0 %v524
    %v526 = vpop.f32.mrf.mxu0
    %v527 = vadd.f32 %v438, %v526
    %v528 = vpop.f32.mrf.mxu0
    %529 = vdwg.mxu0
    %530 = vmatprep.subr.mxu0 0.0
    %v531 = vand.u32 %v78, 4294901760
    %v532 = vsub.f32 %v78, %v531
    %v533 = vand.u32 %v532, 4294901760
    %534 = vmatpush1.msra.mxu0 %v533
    %535 = vmatprep.subr.mxu0 0.0
    %v536 = vand.u32 %v77, 4294901760
    %v537 = vsub.f32 %v77, %v536
    %v538 = vand.u32 %v537, 4294901760
    %539 = vmatpush1.msra.mxu0 %v538
    %540 = vmatprep.subr.mxu0 0.0
    %v541 = vand.u32 %v76, 4294901760
    %v542 = vsub.f32 %v76, %v541
    %v543 = vand.u32 %v542, 4294901760
    %544 = vmatpush1.msra.mxu0 %v543
    %545 = vmatprep.subr.mxu0 0.0
    %v546 = vand.u32 %v75, 4294901760
    %v547 = vsub.f32 %v75, %v546
    %v548 = vand.u32 %v547, 4294901760
    %549 = vmatpush1.msra.mxu0 %v548
    %550 = vmatprep.subr.mxu0 0.0
    %v551 = vand.u32 %v74, 4294901760
    %v552 = vsub.f32 %v74, %v551
    %v553 = vand.u32 %v552, 4294901760
    %554 = vmatpush1.msra.mxu0 %v553
    %555 = vmatprep.subr.mxu0 0.0
    %v556 = vand.u32 %v73, 4294901760
    %v557 = vsub.f32 %v73, %v556
    %v558 = vand.u32 %v557, 4294901760
    %559 = vmatpush1.msra.mxu0 %v558
    %560 = vmatprep.subr.mxu0 0.0
    %v561 = vand.u32 %v72, 4294901760
    %v562 = vsub.f32 %v72, %v561
    %v563 = vand.u32 %v562, 4294901760
    %564 = vmatpush1.msra.mxu0 %v563
    %565 = vmatprep.subr.mxu0 0.0
    %v566 = vand.u32 %v71, 4294901760
    %v567 = vsub.f32 %v71, %v566
    %v568 = vand.u32 %v567, 4294901760
    %569 = vmatpush1.msra.mxu0 %v568
    %570 = vmatprep.subr.mxu0 0.0
    %v571 = vand.u32 %v70, 4294901760
    %v572 = vsub.f32 %v70, %v571
    %v573 = vand.u32 %v572, 4294901760
    %574 = vmatpush1.msra.mxu0 %v573
    %575 = vmatprep.subr.mxu0 0.0
    %v576 = vand.u32 %v69, 4294901760
    %v577 = vsub.f32 %v69, %v576
    %v578 = vand.u32 %v577, 4294901760
    %579 = vmatpush1.msra.mxu0 %v578
    %580 = vmatprep.subr.mxu0 0.0
    %v581 = vand.u32 %v68, 4294901760
    %v582 = vsub.f32 %v68, %v581
    %v583 = vand.u32 %v582, 4294901760
    %584 = vmatpush1.msra.mxu0 %v583
    %585 = vmatprep.subr.mxu0 0.0
    %v586 = vand.u32 %v67, 4294901760
    %v587 = vsub.f32 %v67, %v586
    %v588 = vand.u32 %v587, 4294901760
    %589 = vmatpush1.msra.mxu0 %v588
    %590 = vmatprep.subr.mxu0 0.0
    %v591 = vand.u32 %v66, 4294901760
    %v592 = vsub.f32 %v66, %v591
    %v593 = vand.u32 %v592, 4294901760
    %594 = vmatpush1.msra.mxu0 %v593
    %595 = vmatprep.subr.mxu0 0.0
    %v596 = vand.u32 %v65, 4294901760
    %v597 = vsub.f32 %v65, %v596
    %v598 = vand.u32 %v597, 4294901760
    %599 = vmatpush1.msra.mxu0 %v598
    %600 = vmatprep.subr.mxu0 0.0
    %v601 = vand.u32 %v64, 4294901760
    %v602 = vsub.f32 %v64, %v601
    %v603 = vand.u32 %v602, 4294901760
    %604 = vmatpush1.msra.mxu0 %v603
    %605 = vmatprep.subr.mxu0 0.0
    %v606 = vand.u32 %v63, 4294901760
    %v607 = vsub.f32 %v63, %v606
    %v608 = vand.u32 %v607, 4294901760
    %609 = vmatpush1.msra.mxu0 %v608
    %610 = vmatprep.subr.mxu0 0.0
    %611 = vmatpush2.msra.mxu0 0.0
    %612 = vmatprep.subr.mxu0 0.0
    %613 = vmatpush2.msra.mxu0 0.0
    %614 = vmatprep.subr.mxu0 0.0
    %615 = vmatpush2.msra.mxu0 0.0
    %616 = vmatprep.subr.mxu0 0.0
    %617 = vmatpush2.msra.mxu0 0.0
    %618 = vmatprep.subr.mxu0 0.0
    %619 = vmatpush2.msra.mxu0 0.0
    %620 = vmatprep.subr.mxu0 0.0
    %621 = vmatpush2.msra.mxu0 0.0
    %622 = vmatprep.subr.mxu0 0.0
    %623 = vmatpush2.msra.mxu0 0.0
    %624 = vmatprep.subr.mxu0 0.0
    %625 = vmatpush2.msra.mxu0 0.0
    %626 = vmatprep.subr.mxu0 0.0
    %627 = vmatpush2.msra.mxu0 0.0
    %628 = vmatprep.subr.mxu0 0.0
    %629 = vmatpush2.msra.mxu0 0.0
    %630 = vmatprep.subr.mxu0 0.0
    %631 = vmatpush2.msra.mxu0 0.0
    %632 = vmatprep.subr.mxu0 0.0
    %633 = vmatpush2.msra.mxu0 0.0
    %634 = vmatprep.subr.mxu0 0.0
    %635 = vmatpush2.msra.mxu0 0.0
    %636 = vmatprep.subr.mxu0 0.0
    %637 = vmatpush2.msra.mxu0 0.0
    %638 = vmatprep.subr.mxu0 0.0
    %639 = vmatpush2.msra.mxu0 0.0
    %640 = vmatprep.subr.mxu0 0.0
    %641 = vmatpush2.msra.mxu0 0.0
    %642 = vmatprep.mubr.f32.mxu0 0.0
    %v643 = vand.u32 %v62, 4294901760
    %644 = vmatmul.mubr.f32.gmra.mxu0 %v643
    %v645 = vpop.f32.mrf.mxu0
    %v646 = vadd.f32 %v527, %v645
    %v647 = vpop.f32.mrf.mxu0
    %648 = vdwg.mxu0
    %649 = vmatprep.subr.mxu0 0.0
    %v650 = vand.u32 %v78, 4294901760
    %651 = vmatpush1.msra.mxu0 %v650
    %652 = vmatprep.subr.mxu0 0.0
    %v653 = vand.u32 %v77, 4294901760
    %654 = vmatpush1.msra.mxu0 %v653
    %655 = vmatprep.subr.mxu0 0.0
    %v656 = vand.u32 %v76, 4294901760
    %657 = vmatpush1.msra.mxu0 %v656
    %658 = vmatprep.subr.mxu0 0.0
    %v659 = vand.u32 %v75, 4294901760
    %660 = vmatpush1.msra.mxu0 %v659
    %661 = vmatprep.subr.mxu0 0.0
    %v662 = vand.u32 %v74, 4294901760
    %663 = vmatpush1.msra.mxu0 %v662
    %664 = vmatprep.subr.mxu0 0.0
    %v665 = vand.u32 %v73, 4294901760
    %666 = vmatpush1.msra.mxu0 %v665
    %667 = vmatprep.subr.mxu0 0.0
    %v668 = vand.u32 %v72, 4294901760
    %669 = vmatpush1.msra.mxu0 %v668
    %670 = vmatprep.subr.mxu0 0.0
    %v671 = vand.u32 %v71, 4294901760
    %672 = vmatpush1.msra.mxu0 %v671
    %673 = vmatprep.subr.mxu0 0.0
    %v674 = vand.u32 %v70, 4294901760
    %675 = vmatpush1.msra.mxu0 %v674
    %676 = vmatprep.subr.mxu0 0.0
    %v677 = vand.u32 %v69, 4294901760
    %678 = vmatpush1.msra.mxu0 %v677
    %679 = vmatprep.subr.mxu0 0.0
    %v680 = vand.u32 %v68, 4294901760
    %681 = vmatpush1.msra.mxu0 %v680
    %682 = vmatprep.subr.mxu0 0.0
    %v683 = vand.u32 %v67, 4294901760
    %684 = vmatpush1.msra.mxu0 %v683
    %685 = vmatprep.subr.mxu0 0.0
    %v686 = vand.u32 %v66, 4294901760
    %687 = vmatpush1.msra.mxu0 %v686
    %688 = vmatprep.subr.mxu0 0.0
    %v689 = vand.u32 %v65, 4294901760
    %690 = vmatpush1.msra.mxu0 %v689
    %691 = vmatprep.subr.mxu0 0.0
    %v692 = vand.u32 %v64, 4294901760
    %693 = vmatpush1.msra.mxu0 %v692
    %694 = vmatprep.subr.mxu0 0.0
    %v695 = vand.u32 %v63, 4294901760
    %696 = vmatpush1.msra.mxu0 %v695
    %697 = vmatprep.subr.mxu0 0.0
    %698 = vmatpush2.msra.mxu0 0.0
    %699 = vmatprep.subr.mxu0 0.0
    %700 = vmatpush2.msra.mxu0 0.0
    %701 = vmatprep.subr.mxu0 0.0
    %702 = vmatpush2.msra.mxu0 0.0
    %703 = vmatprep.subr.mxu0 0.0
    %704 = vmatpush2.msra.mxu0 0.0
    %705 = vmatprep.subr.mxu0 0.0
    %706 = vmatpush2.msra.mxu0 0.0
    %707 = vmatprep.subr.mxu0 0.0
    %708 = vmatpush2.msra.mxu0 0.0
    %709 = vmatprep.subr.mxu0 0.0
    %710 = vmatpush2.msra.mxu0 0.0
    %711 = vmatprep.subr.mxu0 0.0
    %712 = vmatpush2.msra.mxu0 0.0
    %713 = vmatprep.subr.mxu0 0.0
    %714 = vmatpush2.msra.mxu0 0.0
    %715 = vmatprep.subr.mxu0 0.0
    %716 = vmatpush2.msra.mxu0 0.0
    %717 = vmatprep.subr.mxu0 0.0
    %718 = vmatpush2.msra.mxu0 0.0
    %719 = vmatprep.subr.mxu0 0.0
    %720 = vmatpush2.msra.mxu0 0.0
    %721 = vmatprep.subr.mxu0 0.0
    %722 = vmatpush2.msra.mxu0 0.0
    %723 = vmatprep.subr.mxu0 0.0
    %724 = vmatpush2.msra.mxu0 0.0
    %725 = vmatprep.subr.mxu0 0.0
    %726 = vmatpush2.msra.mxu0 0.0
    %727 = vmatprep.subr.mxu0 0.0
    %728 = vmatpush2.msra.mxu0 0.0
    %729 = vmatprep.mubr.f32.mxu0 0.0
    %v730 = vand.u32 %v62, 4294901760
    %731 = vmatmul.mubr.f32.gmra.mxu0 %v730
    %v732 = vpop.f32.mrf.mxu0
    %v733 = vadd.f32 %v646, %v732
    %v734 = vpop.f32.mrf.mxu0
    %735 = vdwg.mxu0
    %v736 = vmul.f32 %v733, 0.03125
    %737 = vmatprep.subr.mxu0 0.0
    %v738 = vand.u32 %v94, 4294901760
    %739 = vmatpush1.msra.mxu0 %v738
    %740 = vmatprep.subr.mxu0 0.0
    %v741 = vand.u32 %v93, 4294901760
    %742 = vmatpush1.msra.mxu0 %v741
    %743 = vmatprep.subr.mxu0 0.0
    %v744 = vand.u32 %v92, 4294901760
    %745 = vmatpush1.msra.mxu0 %v744
    %746 = vmatprep.subr.mxu0 0.0
    %v747 = vand.u32 %v91, 4294901760
    %748 = vmatpush1.msra.mxu0 %v747
    %749 = vmatprep.subr.mxu0 0.0
    %v750 = vand.u32 %v90, 4294901760
    %751 = vmatpush1.msra.mxu0 %v750
    %752 = vmatprep.subr.mxu0 0.0
    %v753 = vand.u32 %v89, 4294901760
    %754 = vmatpush1.msra.mxu0 %v753
    %755 = vmatprep.subr.mxu0 0.0
    %v756 = vand.u32 %v88, 4294901760
    %757 = vmatpush1.msra.mxu0 %v756
    %758 = vmatprep.subr.mxu0 0.0
    %v759 = vand.u32 %v87, 4294901760
    %760 = vmatpush1.msra.mxu0 %v759
    %761 = vmatprep.subr.mxu0 0.0
    %v762 = vand.u32 %v86, 4294901760
    %763 = vmatpush1.msra.mxu0 %v762
    %764 = vmatprep.subr.mxu0 0.0
    %v765 = vand.u32 %v85, 4294901760
    %766 = vmatpush1.msra.mxu0 %v765
    %767 = vmatprep.subr.mxu0 0.0
    %v768 = vand.u32 %v84, 4294901760
    %769 = vmatpush1.msra.mxu0 %v768
    %770 = vmatprep.subr.mxu0 0.0
    %v771 = vand.u32 %v83, 4294901760
    %772 = vmatpush1.msra.mxu0 %v771
    %773 = vmatprep.subr.mxu0 0.0
    %v774 = vand.u32 %v82, 4294901760
    %775 = vmatpush1.msra.mxu0 %v774
    %776 = vmatprep.subr.mxu0 0.0
    %v777 = vand.u32 %v81, 4294901760
    %778 = vmatpush1.msra.mxu0 %v777
    %779 = vmatprep.subr.mxu0 0.0
    %v780 = vand.u32 %v80, 4294901760
    %781 = vmatpush1.msra.mxu0 %v780
    %782 = vmatprep.subr.mxu0 0.0
    %v783 = vand.u32 %v79, 4294901760
    %784 = vmatpush1.msra.mxu0 %v783
    %785 = vmatprep.subr.mxu0 0.0
    %786 = vmatpush2.msra.mxu0 0.0
    %787 = vmatprep.subr.mxu0 0.0
    %788 = vmatpush2.msra.mxu0 0.0
    %789 = vmatprep.subr.mxu0 0.0
    %790 = vmatpush2.msra.mxu0 0.0
    %791 = vmatprep.subr.mxu0 0.0
    %792 = vmatpush2.msra.mxu0 0.0
    %793 = vmatprep.subr.mxu0 0.0
    %794 = vmatpush2.msra.mxu0 0.0
    %795 = vmatprep.subr.mxu0 0.0
    %796 = vmatpush2.msra.mxu0 0.0
    %797 = vmatprep.subr.mxu0 0.0
    %798 = vmatpush2.msra.mxu0 0.0
    %799 = vmatprep.subr.mxu0 0.0
    %800 = vmatpush2.msra.mxu0 0.0
    %801 = vmatprep.subr.mxu0 0.0
    %802 = vmatpush2.msra.mxu0 0.0
    %803 = vmatprep.subr.mxu0 0.0
    %804 = vmatpush2.msra.mxu0 0.0
    %805 = vmatprep.subr.mxu0 0.0
    %806 = vmatpush2.msra.mxu0 0.0
    %807 = vmatprep.subr.mxu0 0.0
    %808 = vmatpush2.msra.mxu0 0.0
    %809 = vmatprep.subr.mxu0 0.0
    %810 = vmatpush2.msra.mxu0 0.0
    %811 = vmatprep.subr.mxu0 0.0
    %812 = vmatpush2.msra.mxu0 0.0
    %813 = vmatprep.subr.mxu0 0.0
    %814 = vmatpush2.msra.mxu0 0.0
    %815 = vmatprep.subr.mxu0 0.0
    %816 = vmatpush2.msra.mxu0 0.0
    %817 = vmatprep.mubr.f32.mxu0 0.0
    %v818 = vand.u32 %v736, 4294901760
    %v819 = vsub.f32 %v736, %v818
    %v820 = vand.u32 %v819, 4294901760
    %v821 = vsub.f32 %v819, %v820
    %v822 = vand.u32 %v821, 4294901760
    %823 = vmatmul.mubr.f32.gmra.mxu0 %v822
    %v824 = vpop.f32.mrf.mxu0
    %v825 = vadd.f32 0.0, %v824
    %v826 = vpop.f32.mrf.mxu0
    %827 = vdwg.mxu0
    %828 = vmatprep.subr.mxu0 0.0
    %v829 = vand.u32 %v94, 4294901760
    %v830 = vsub.f32 %v94, %v829
    %v831 = vand.u32 %v830, 4294901760
    %v832 = vsub.f32 %v830, %v831
    %v833 = vand.u32 %v832, 4294901760
    %834 = vmatpush1.msra.mxu0 %v833
    %835 = vmatprep.subr.mxu0 0.0
    %v836 = vand.u32 %v93, 4294901760
    %v837 = vsub.f32 %v93, %v836
    %v838 = vand.u32 %v837, 4294901760
    %v839 = vsub.f32 %v837, %v838
    %v840 = vand.u32 %v839, 4294901760
    %841 = vmatpush1.msra.mxu0 %v840
    %842 = vmatprep.subr.mxu0 0.0
    %v843 = vand.u32 %v92, 4294901760
    %v844 = vsub.f32 %v92, %v843
    %v845 = vand.u32 %v844, 4294901760
    %v846 = vsub.f32 %v844, %v845
    %v847 = vand.u32 %v846, 4294901760
    %848 = vmatpush1.msra.mxu0 %v847
    %849 = vmatprep.subr.mxu0 0.0
    %v850 = vand.u32 %v91, 4294901760
    %v851 = vsub.f32 %v91, %v850
    %v852 = vand.u32 %v851, 4294901760
    %v853 = vsub.f32 %v851, %v852
    %v854 = vand.u32 %v853, 4294901760
    %855 = vmatpush1.msra.mxu0 %v854
    %856 = vmatprep.subr.mxu0 0.0
    %v857 = vand.u32 %v90, 4294901760
    %v858 = vsub.f32 %v90, %v857
    %v859 = vand.u32 %v858, 4294901760
    %v860 = vsub.f32 %v858, %v859
    %v861 = vand.u32 %v860, 4294901760
    %862 = vmatpush1.msra.mxu0 %v861
    %863 = vmatprep.subr.mxu0 0.0
    %v864 = vand.u32 %v89, 4294901760
    %v865 = vsub.f32 %v89, %v864
    %v866 = vand.u32 %v865, 4294901760
    %v867 = vsub.f32 %v865, %v866
    %v868 = vand.u32 %v867, 4294901760
    %869 = vmatpush1.msra.mxu0 %v868
    %870 = vmatprep.subr.mxu0 0.0
    %v871 = vand.u32 %v88, 4294901760
    %v872 = vsub.f32 %v88, %v871
    %v873 = vand.u32 %v872, 4294901760
    %v874 = vsub.f32 %v872, %v873
    %v875 = vand.u32 %v874, 4294901760
    %876 = vmatpush1.msra.mxu0 %v875
    %877 = vmatprep.subr.mxu0 0.0
    %v878 = vand.u32 %v87, 4294901760
    %v879 = vsub.f32 %v87, %v878
    %v880 = vand.u32 %v879, 4294901760
    %v881 = vsub.f32 %v879, %v880
    %v882 = vand.u32 %v881, 4294901760
    %883 = vmatpush1.msra.mxu0 %v882
    %884 = vmatprep.subr.mxu0 0.0
    %v885 = vand.u32 %v86, 4294901760
    %v886 = vsub.f32 %v86, %v885
    %v887 = vand.u32 %v886, 4294901760
    %v888 = vsub.f32 %v886, %v887
    %v889 = vand.u32 %v888, 4294901760
    %890 = vmatpush1.msra.mxu0 %v889
    %891 = vmatprep.subr.mxu0 0.0
    %v892 = vand.u32 %v85, 4294901760
    %v893 = vsub.f32 %v85, %v892
    %v894 = vand.u32 %v893, 4294901760
    %v895 = vsub.f32 %v893, %v894
    %v896 = vand.u32 %v895, 4294901760
    %897 = vmatpush1.msra.mxu0 %v896
    %898 = vmatprep.subr.mxu0 0.0
    %v899 = vand.u32 %v84, 4294901760
    %v900 = vsub.f32 %v84, %v899
    %v901 = vand.u32 %v900, 4294901760
    %v902 = vsub.f32 %v900, %v901
    %v903 = vand.u32 %v902, 4294901760
    %904 = vmatpush1.msra.mxu0 %v903
    %905 = vmatprep.subr.mxu0 0.0
    %v906 = vand.u32 %v83, 4294901760
    %v907 = vsub.f32 %v83, %v906
    %v908 = vand.u32 %v907, 4294901760
    %v909 = vsub.f32 %v907, %v908
    %v910 = vand.u32 %v909, 4294901760
    %911 = vmatpush1.msra.mxu0 %v910
    %912 = vmatprep.subr.mxu0 0.0
    %v913 = vand.u32 %v82, 4294901760
    %v914 = vsub.f32 %v82, %v913
    %v915 = vand.u32 %v914, 4294901760
    %v916 = vsub.f32 %v914, %v915
    %v917 = vand.u32 %v916, 4294901760
    %918 = vmatpush1.msra.mxu0 %v917
    %919 = vmatprep.subr.mxu0 0.0
    %v920 = vand.u32 %v81, 4294901760
    %v921 = vsub.f32 %v81, %v920
    %v922 = vand.u32 %v921, 4294901760
    %v923 = vsub.f32 %v921, %v922
    %v924 = vand.u32 %v923, 4294901760
    %925 = vmatpush1.msra.mxu0 %v924
    %926 = vmatprep.subr.mxu0 0.0
    %v927 = vand.u32 %v80, 4294901760
    %v928 = vsub.f32 %v80, %v927
    %v929 = vand.u32 %v928, 4294901760
    %v930 = vsub.f32 %v928, %v929
    %v931 = vand.u32 %v930, 4294901760
    %932 = vmatpush1.msra.mxu0 %v931
    %933 = vmatprep.subr.mxu0 0.0
    %v934 = vand.u32 %v79, 4294901760
    %v935 = vsub.f32 %v79, %v934
    %v936 = vand.u32 %v935, 4294901760
    %v937 = vsub.f32 %v935, %v936
    %v938 = vand.u32 %v937, 4294901760
    %939 = vmatpush1.msra.mxu0 %v938
    %940 = vmatprep.subr.mxu0 0.0
    %941 = vmatpush2.msra.mxu0 0.0
    %942 = vmatprep.subr.mxu0 0.0
    %943 = vmatpush2.msra.mxu0 0.0
    %944 = vmatprep.subr.mxu0 0.0
    %945 = vmatpush2.msra.mxu0 0.0
    %946 = vmatprep.subr.mxu0 0.0
    %947 = vmatpush2.msra.mxu0 0.0
    %948 = vmatprep.subr.mxu0 0.0
    %949 = vmatpush2.msra.mxu0 0.0
    %950 = vmatprep.subr.mxu0 0.0
    %951 = vmatpush2.msra.mxu0 0.0
    %952 = vmatprep.subr.mxu0 0.0
    %953 = vmatpush2.msra.mxu0 0.0
    %954 = vmatprep.subr.mxu0 0.0
    %955 = vmatpush2.msra.mxu0 0.0
    %956 = vmatprep.subr.mxu0 0.0
    %957 = vmatpush2.msra.mxu0 0.0
    %958 = vmatprep.subr.mxu0 0.0
    %959 = vmatpush2.msra.mxu0 0.0
    %960 = vmatprep.subr.mxu0 0.0
    %961 = vmatpush2.msra.mxu0 0.0
    %962 = vmatprep.subr.mxu0 0.0
    %963 = vmatpush2.msra.mxu0 0.0
    %964 = vmatprep.subr.mxu0 0.0
    %965 = vmatpush2.msra.mxu0 0.0
    %966 = vmatprep.subr.mxu0 0.0
    %967 = vmatpush2.msra.mxu0 0.0
    %968 = vmatprep.subr.mxu0 0.0
    %969 = vmatpush2.msra.mxu0 0.0
    %970 = vmatprep.subr.mxu0 0.0
    %971 = vmatpush2.msra.mxu0 0.0
    %972 = vmatprep.mubr.f32.mxu0 0.0
    %v973 = vand.u32 %v736, 4294901760
    %974 = vmatmul.mubr.f32.gmra.mxu0 %v973
    %v975 = vpop.f32.mrf.mxu0
    %v976 = vadd.f32 %v825, %v975
    %v977 = vpop.f32.mrf.mxu0
    %978 = vdwg.mxu0
    %979 = vmatprep.subr.mxu0 0.0
    %v980 = vand.u32 %v94, 4294901760
    %v981 = vsub.f32 %v94, %v980
    %982 = vmatpush1.msra.mxu0 %v981
    %983 = vmatprep.subr.mxu0 0.0
    %v984 = vand.u32 %v93, 4294901760
    %v985 = vsub.f32 %v93, %v984
    %986 = vmatpush1.msra.mxu0 %v985
    %987 = vmatprep.subr.mxu0 0.0
    %v988 = vand.u32 %v92, 4294901760
    %v989 = vsub.f32 %v92, %v988
    %990 = vmatpush1.msra.mxu0 %v989
    %991 = vmatprep.subr.mxu0 0.0
    %v992 = vand.u32 %v91, 4294901760
    %v993 = vsub.f32 %v91, %v992
    %994 = vmatpush1.msra.mxu0 %v993
    %995 = vmatprep.subr.mxu0 0.0
    %v996 = vand.u32 %v90, 4294901760
    %v997 = vsub.f32 %v90, %v996
    %998 = vmatpush1.msra.mxu0 %v997
    %999 = vmatprep.subr.mxu0 0.0
    %v1000 = vand.u32 %v89, 4294901760
    %v1001 = vsub.f32 %v89, %v1000
    %1002 = vmatpush1.msra.mxu0 %v1001
    %1003 = vmatprep.subr.mxu0 0.0
    %v1004 = vand.u32 %v88, 4294901760
    %v1005 = vsub.f32 %v88, %v1004
    %1006 = vmatpush1.msra.mxu0 %v1005
    %1007 = vmatprep.subr.mxu0 0.0
    %v1008 = vand.u32 %v87, 4294901760
    %v1009 = vsub.f32 %v87, %v1008
    %1010 = vmatpush1.msra.mxu0 %v1009
    %1011 = vmatprep.subr.mxu0 0.0
    %v1012 = vand.u32 %v86, 4294901760
    %v1013 = vsub.f32 %v86, %v1012
    %1014 = vmatpush1.msra.mxu0 %v1013
    %1015 = vmatprep.subr.mxu0 0.0
    %v1016 = vand.u32 %v85, 4294901760
    %v1017 = vsub.f32 %v85, %v1016
    %1018 = vmatpush1.msra.mxu0 %v1017
    %1019 = vmatprep.subr.mxu0 0.0
    %v1020 = vand.u32 %v84, 4294901760
    %v1021 = vsub.f32 %v84, %v1020
    %1022 = vmatpush1.msra.mxu0 %v1021
    %1023 = vmatprep.subr.mxu0 0.0
    %v1024 = vand.u32 %v83, 4294901760
    %v1025 = vsub.f32 %v83, %v1024
    %1026 = vmatpush1.msra.mxu0 %v1025
    %1027 = vmatprep.subr.mxu0 0.0
    %v1028 = vand.u32 %v82, 4294901760
    %v1029 = vsub.f32 %v82, %v1028
    %1030 = vmatpush1.msra.mxu0 %v1029
    %1031 = vmatprep.subr.mxu0 0.0
    %v1032 = vand.u32 %v81, 4294901760
    %v1033 = vsub.f32 %v81, %v1032
    %1034 = vmatpush1.msra.mxu0 %v1033
    %1035 = vmatprep.subr.mxu0 0.0
    %v1036 = vand.u32 %v80, 4294901760
    %v1037 = vsub.f32 %v80, %v1036
    %1038 = vmatpush1.msra.mxu0 %v1037
    %1039 = vmatprep.subr.mxu0 0.0
    %v1040 = vand.u32 %v79, 4294901760
    %v1041 = vsub.f32 %v79, %v1040
    %1042 = vmatpush1.msra.mxu0 %v1041
    %1043 = vmatprep.subr.mxu0 0.0
    %1044 = vmatpush2.msra.mxu0 0.0
    %1045 = vmatprep.subr.mxu0 0.0
    %1046 = vmatpush2.msra.mxu0 0.0
    %1047 = vmatprep.subr.mxu0 0.0
    %1048 = vmatpush2.msra.mxu0 0.0
    %1049 = vmatprep.subr.mxu0 0.0
    %1050 = vmatpush2.msra.mxu0 0.0
    %1051 = vmatprep.subr.mxu0 0.0
    %1052 = vmatpush2.msra.mxu0 0.0
    %1053 = vmatprep.subr.mxu0 0.0
    %1054 = vmatpush2.msra.mxu0 0.0
    %1055 = vmatprep.subr.mxu0 0.0
    %1056 = vmatpush2.msra.mxu0 0.0
    %1057 = vmatprep.subr.mxu0 0.0
    %1058 = vmatpush2.msra.mxu0 0.0
    %1059 = vmatprep.subr.mxu0 0.0
    %1060 = vmatpush2.msra.mxu0 0.0
    %1061 = vmatprep.subr.mxu0 0.0
    %1062 = vmatpush2.msra.mxu0 0.0
    %1063 = vmatprep.subr.mxu0 0.0
    %1064 = vmatpush2.msra.mxu0 0.0
    %1065 = vmatprep.subr.mxu0 0.0
    %1066 = vmatpush2.msra.mxu0 0.0
    %1067 = vmatprep.subr.mxu0 0.0
    %1068 = vmatpush2.msra.mxu0 0.0
    %1069 = vmatprep.subr.mxu0 0.0
    %1070 = vmatpush2.msra.mxu0 0.0
    %1071 = vmatprep.subr.mxu0 0.0
    %1072 = vmatpush2.msra.mxu0 0.0
    %1073 = vmatprep.subr.mxu0 0.0
    %1074 = vmatpush2.msra.mxu0 0.0
    %1075 = vmatprep.mubr.f32.mxu0 0.0
    %v1076 = vand.u32 %v736, 4294901760
    %v1077 = vsub.f32 %v736, %v1076
    %1078 = vmatmul.mubr.f32.gmra.mxu0 %v1077
    %v1079 = vpop.f32.mrf.mxu0
    %v1080 = vadd.f32 %v976, %v1079
    %v1081 = vpop.f32.mrf.mxu0
    %1082 = vdwg.mxu0
    %1083 = vmatprep.subr.mxu0 0.0
    %v1084 = vand.u32 %v94, 4294901760
    %1085 = vmatpush1.msra.mxu0 %v1084
    %1086 = vmatprep.subr.mxu0 0.0
    %v1087 = vand.u32 %v93, 4294901760
    %1088 = vmatpush1.msra.mxu0 %v1087
    %1089 = vmatprep.subr.mxu0 0.0
    %v1090 = vand.u32 %v92, 4294901760
    %1091 = vmatpush1.msra.mxu0 %v1090
    %1092 = vmatprep.subr.mxu0 0.0
    %v1093 = vand.u32 %v91, 4294901760
    %1094 = vmatpush1.msra.mxu0 %v1093
    %1095 = vmatprep.subr.mxu0 0.0
    %v1096 = vand.u32 %v90, 4294901760
    %1097 = vmatpush1.msra.mxu0 %v1096
    %1098 = vmatprep.subr.mxu0 0.0
    %v1099 = vand.u32 %v89, 4294901760
    %1100 = vmatpush1.msra.mxu0 %v1099
    %1101 = vmatprep.subr.mxu0 0.0
    %v1102 = vand.u32 %v88, 4294901760
    %1103 = vmatpush1.msra.mxu0 %v1102
    %1104 = vmatprep.subr.mxu0 0.0
    %v1105 = vand.u32 %v87, 4294901760
    %1106 = vmatpush1.msra.mxu0 %v1105
    %1107 = vmatprep.subr.mxu0 0.0
    %v1108 = vand.u32 %v86, 4294901760
    %1109 = vmatpush1.msra.mxu0 %v1108
    %1110 = vmatprep.subr.mxu0 0.0
    %v1111 = vand.u32 %v85, 4294901760
    %1112 = vmatpush1.msra.mxu0 %v1111
    %1113 = vmatprep.subr.mxu0 0.0
    %v1114 = vand.u32 %v84, 4294901760
    %1115 = vmatpush1.msra.mxu0 %v1114
    %1116 = vmatprep.subr.mxu0 0.0
    %v1117 = vand.u32 %v83, 4294901760
    %1118 = vmatpush1.msra.mxu0 %v1117
    %1119 = vmatprep.subr.mxu0 0.0
    %v1120 = vand.u32 %v82, 4294901760
    %1121 = vmatpush1.msra.mxu0 %v1120
    %1122 = vmatprep.subr.mxu0 0.0
    %v1123 = vand.u32 %v81, 4294901760
    %1124 = vmatpush1.msra.mxu0 %v1123
    %1125 = vmatprep.subr.mxu0 0.0
    %v1126 = vand.u32 %v80, 4294901760
    %1127 = vmatpush1.msra.mxu0 %v1126
    %1128 = vmatprep.subr.mxu0 0.0
    %v1129 = vand.u32 %v79, 4294901760
    %1130 = vmatpush1.msra.mxu0 %v1129
    %1131 = vmatprep.subr.mxu0 0.0
    %1132 = vmatpush2.msra.mxu0 0.0
    %1133 = vmatprep.subr.mxu0 0.0
    %1134 = vmatpush2.msra.mxu0 0.0
    %1135 = vmatprep.subr.mxu0 0.0
    %1136 = vmatpush2.msra.mxu0 0.0
    %1137 = vmatprep.subr.mxu0 0.0
    %1138 = vmatpush2.msra.mxu0 0.0
    %1139 = vmatprep.subr.mxu0 0.0
    %1140 = vmatpush2.msra.mxu0 0.0
    %1141 = vmatprep.subr.mxu0 0.0
    %1142 = vmatpush2.msra.mxu0 0.0
    %1143 = vmatprep.subr.mxu0 0.0
    %1144 = vmatpush2.msra.mxu0 0.0
    %1145 = vmatprep.subr.mxu0 0.0
    %1146 = vmatpush2.msra.mxu0 0.0
    %1147 = vmatprep.subr.mxu0 0.0
    %1148 = vmatpush2.msra.mxu0 0.0
    %1149 = vmatprep.subr.mxu0 0.0
    %1150 = vmatpush2.msra.mxu0 0.0
    %1151 = vmatprep.subr.mxu0 0.0
    %1152 = vmatpush2.msra.mxu0 0.0
    %1153 = vmatprep.subr.mxu0 0.0
    %1154 = vmatpush2.msra.mxu0 0.0
    %1155 = vmatprep.subr.mxu0 0.0
    %1156 = vmatpush2.msra.mxu0 0.0
    %1157 = vmatprep.subr.mxu0 0.0
    %1158 = vmatpush2.msra.mxu0 0.0
    %1159 = vmatprep.subr.mxu0 0.0
    %1160 = vmatpush2.msra.mxu0 0.0
    %1161 = vmatprep.subr.mxu0 0.0
    %1162 = vmatpush2.msra.mxu0 0.0
    %1163 = vmatprep.mubr.f32.mxu0 0.0
    %v1164 = vand.u32 %v736, 4294901760
    %v1165 = vsub.f32 %v736, %v1164
    %v1166 = vand.u32 %v1165, 4294901760
    %1167 = vmatmul.mubr.f32.gmra.mxu0 %v1166
    %v1168 = vpop.f32.mrf.mxu0
    %v1169 = vadd.f32 %v1080, %v1168
    %v1170 = vpop.f32.mrf.mxu0
    %1171 = vdwg.mxu0
    %1172 = vmatprep.subr.mxu0 0.0
    %v1173 = vand.u32 %v94, 4294901760
    %v1174 = vsub.f32 %v94, %v1173
    %v1175 = vand.u32 %v1174, 4294901760
    %1176 = vmatpush1.msra.mxu0 %v1175
    %1177 = vmatprep.subr.mxu0 0.0
    %v1178 = vand.u32 %v93, 4294901760
    %v1179 = vsub.f32 %v93, %v1178
    %v1180 = vand.u32 %v1179, 4294901760
    %1181 = vmatpush1.msra.mxu0 %v1180
    %1182 = vmatprep.subr.mxu0 0.0
    %v1183 = vand.u32 %v92, 4294901760
    %v1184 = vsub.f32 %v92, %v1183
    %v1185 = vand.u32 %v1184, 4294901760
    %1186 = vmatpush1.msra.mxu0 %v1185
    %1187 = vmatprep.subr.mxu0 0.0
    %v1188 = vand.u32 %v91, 4294901760
    %v1189 = vsub.f32 %v91, %v1188
    %v1190 = vand.u32 %v1189, 4294901760
    %1191 = vmatpush1.msra.mxu0 %v1190
    %1192 = vmatprep.subr.mxu0 0.0
    %v1193 = vand.u32 %v90, 4294901760
    %v1194 = vsub.f32 %v90, %v1193
    %v1195 = vand.u32 %v1194, 4294901760
    %1196 = vmatpush1.msra.mxu0 %v1195
    %1197 = vmatprep.subr.mxu0 0.0
    %v1198 = vand.u32 %v89, 4294901760
    %v1199 = vsub.f32 %v89, %v1198
    %v1200 = vand.u32 %v1199, 4294901760
    %1201 = vmatpush1.msra.mxu0 %v1200
    %1202 = vmatprep.subr.mxu0 0.0
    %v1203 = vand.u32 %v88, 4294901760
    %v1204 = vsub.f32 %v88, %v1203
    %v1205 = vand.u32 %v1204, 4294901760
    %1206 = vmatpush1.msra.mxu0 %v1205
    %1207 = vmatprep.subr.mxu0 0.0
    %v1208 = vand.u32 %v87, 4294901760
    %v1209 = vsub.f32 %v87, %v1208
    %v1210 = vand.u32 %v1209, 4294901760
    %1211 = vmatpush1.msra.mxu0 %v1210
    %1212 = vmatprep.subr.mxu0 0.0
    %v1213 = vand.u32 %v86, 4294901760
    %v1214 = vsub.f32 %v86, %v1213
    %v1215 = vand.u32 %v1214, 4294901760
    %1216 = vmatpush1.msra.mxu0 %v1215
    %1217 = vmatprep.subr.mxu0 0.0
    %v1218 = vand.u32 %v85, 4294901760
    %v1219 = vsub.f32 %v85, %v1218
    %v1220 = vand.u32 %v1219, 4294901760
    %1221 = vmatpush1.msra.mxu0 %v1220
    %1222 = vmatprep.subr.mxu0 0.0
    %v1223 = vand.u32 %v84, 4294901760
    %v1224 = vsub.f32 %v84, %v1223
    %v1225 = vand.u32 %v1224, 4294901760
    %1226 = vmatpush1.msra.mxu0 %v1225
    %1227 = vmatprep.subr.mxu0 0.0
    %v1228 = vand.u32 %v83, 4294901760
    %v1229 = vsub.f32 %v83, %v1228
    %v1230 = vand.u32 %v1229, 4294901760
    %1231 = vmatpush1.msra.mxu0 %v1230
    %1232 = vmatprep.subr.mxu0 0.0
    %v1233 = vand.u32 %v82, 4294901760
    %v1234 = vsub.f32 %v82, %v1233
    %v1235 = vand.u32 %v1234, 4294901760
    %1236 = vmatpush1.msra.mxu0 %v1235
    %1237 = vmatprep.subr.mxu0 0.0
    %v1238 = vand.u32 %v81, 4294901760
    %v1239 = vsub.f32 %v81, %v1238
    %v1240 = vand.u32 %v1239, 4294901760
    %1241 = vmatpush1.msra.mxu0 %v1240
    %1242 = vmatprep.subr.mxu0 0.0
    %v1243 = vand.u32 %v80, 4294901760
    %v1244 = vsub.f32 %v80, %v1243
    %v1245 = vand.u32 %v1244, 4294901760
    %1246 = vmatpush1.msra.mxu0 %v1245
    %1247 = vmatprep.subr.mxu0 0.0
    %v1248 = vand.u32 %v79, 4294901760
    %v1249 = vsub.f32 %v79, %v1248
    %v1250 = vand.u32 %v1249, 4294901760
    %1251 = vmatpush1.msra.mxu0 %v1250
    %1252 = vmatprep.subr.mxu0 0.0
    %1253 = vmatpush2.msra.mxu0 0.0
    %1254 = vmatprep.subr.mxu0 0.0
    %1255 = vmatpush2.msra.mxu0 0.0
    %1256 = vmatprep.subr.mxu0 0.0
    %1257 = vmatpush2.msra.mxu0 0.0
    %1258 = vmatprep.subr.mxu0 0.0
    %1259 = vmatpush2.msra.mxu0 0.0
    %1260 = vmatprep.subr.mxu0 0.0
    %1261 = vmatpush2.msra.mxu0 0.0
    %1262 = vmatprep.subr.mxu0 0.0
    %1263 = vmatpush2.msra.mxu0 0.0
    %1264 = vmatprep.subr.mxu0 0.0
    %1265 = vmatpush2.msra.mxu0 0.0
    %1266 = vmatprep.subr.mxu0 0.0
    %1267 = vmatpush2.msra.mxu0 0.0
    %1268 = vmatprep.subr.mxu0 0.0
    %1269 = vmatpush2.msra.mxu0 0.0
    %1270 = vmatprep.subr.mxu0 0.0
    %1271 = vmatpush2.msra.mxu0 0.0
    %1272 = vmatprep.subr.mxu0 0.0
    %1273 = vmatpush2.msra.mxu0 0.0
    %1274 = vmatprep.subr.mxu0 0.0
    %1275 = vmatpush2.msra.mxu0 0.0
    %1276 = vmatprep.subr.mxu0 0.0
    %1277 = vmatpush2.msra.mxu0 0.0
    %1278 = vmatprep.subr.mxu0 0.0
    %1279 = vmatpush2.msra.mxu0 0.0
    %1280 = vmatprep.subr.mxu0 0.0
    %1281 = vmatpush2.msra.mxu0 0.0
    %1282 = vmatprep.subr.mxu0 0.0
    %1283 = vmatpush2.msra.mxu0 0.0
    %1284 = vmatprep.mubr.f32.mxu0 0.0
    %v1285 = vand.u32 %v736, 4294901760
    %1286 = vmatmul.mubr.f32.gmra.mxu0 %v1285
    %v1287 = vpop.f32.mrf.mxu0
    %v1288 = vadd.f32 %v1169, %v1287
    %v1289 = vpop.f32.mrf.mxu0
    %1290 = vdwg.mxu0
    %1291 = vmatprep.subr.mxu0 0.0
    %v1292 = vand.u32 %v94, 4294901760
    %1293 = vmatpush1.msra.mxu0 %v1292
    %1294 = vmatprep.subr.mxu0 0.0
    %v1295 = vand.u32 %v93, 4294901760
    %1296 = vmatpush1.msra.mxu0 %v1295
    %1297 = vmatprep.subr.mxu0 0.0
    %v1298 = vand.u32 %v92, 4294901760
    %1299 = vmatpush1.msra.mxu0 %v1298
    %1300 = vmatprep.subr.mxu0 0.0
    %v1301 = vand.u32 %v91, 4294901760
    %1302 = vmatpush1.msra.mxu0 %v1301
    %1303 = vmatprep.subr.mxu0 0.0
    %v1304 = vand.u32 %v90, 4294901760
    %1305 = vmatpush1.msra.mxu0 %v1304
    %1306 = vmatprep.subr.mxu0 0.0
    %v1307 = vand.u32 %v89, 4294901760
    %1308 = vmatpush1.msra.mxu0 %v1307
    %1309 = vmatprep.subr.mxu0 0.0
    %v1310 = vand.u32 %v88, 4294901760
    %1311 = vmatpush1.msra.mxu0 %v1310
    %1312 = vmatprep.subr.mxu0 0.0
    %v1313 = vand.u32 %v87, 4294901760
    %1314 = vmatpush1.msra.mxu0 %v1313
    %1315 = vmatprep.subr.mxu0 0.0
    %v1316 = vand.u32 %v86, 4294901760
    %1317 = vmatpush1.msra.mxu0 %v1316
    %1318 = vmatprep.subr.mxu0 0.0
    %v1319 = vand.u32 %v85, 4294901760
    %1320 = vmatpush1.msra.mxu0 %v1319
    %1321 = vmatprep.subr.mxu0 0.0
    %v1322 = vand.u32 %v84, 4294901760
    %1323 = vmatpush1.msra.mxu0 %v1322
    %1324 = vmatprep.subr.mxu0 0.0
    %v1325 = vand.u32 %v83, 4294901760
    %1326 = vmatpush1.msra.mxu0 %v1325
    %1327 = vmatprep.subr.mxu0 0.0
    %v1328 = vand.u32 %v82, 4294901760
    %1329 = vmatpush1.msra.mxu0 %v1328
    %1330 = vmatprep.subr.mxu0 0.0
    %v1331 = vand.u32 %v81, 4294901760
    %1332 = vmatpush1.msra.mxu0 %v1331
    %1333 = vmatprep.subr.mxu0 0.0
    %v1334 = vand.u32 %v80, 4294901760
    %1335 = vmatpush1.msra.mxu0 %v1334
    %1336 = vmatprep.subr.mxu0 0.0
    %v1337 = vand.u32 %v79, 4294901760
    %1338 = vmatpush1.msra.mxu0 %v1337
    %1339 = vmatprep.subr.mxu0 0.0
    %1340 = vmatpush2.msra.mxu0 0.0
    %1341 = vmatprep.subr.mxu0 0.0
    %1342 = vmatpush2.msra.mxu0 0.0
    %1343 = vmatprep.subr.mxu0 0.0
    %1344 = vmatpush2.msra.mxu0 0.0
    %1345 = vmatprep.subr.mxu0 0.0
    %1346 = vmatpush2.msra.mxu0 0.0
    %1347 = vmatprep.subr.mxu0 0.0
    %1348 = vmatpush2.msra.mxu0 0.0
    %1349 = vmatprep.subr.mxu0 0.0
    %1350 = vmatpush2.msra.mxu0 0.0
    %1351 = vmatprep.subr.mxu0 0.0
    %1352 = vmatpush2.msra.mxu0 0.0
    %1353 = vmatprep.subr.mxu0 0.0
    %1354 = vmatpush2.msra.mxu0 0.0
    %1355 = vmatprep.subr.mxu0 0.0
    %1356 = vmatpush2.msra.mxu0 0.0
    %1357 = vmatprep.subr.mxu0 0.0
    %1358 = vmatpush2.msra.mxu0 0.0
    %1359 = vmatprep.subr.mxu0 0.0
    %1360 = vmatpush2.msra.mxu0 0.0
    %1361 = vmatprep.subr.mxu0 0.0
    %1362 = vmatpush2.msra.mxu0 0.0
    %1363 = vmatprep.subr.mxu0 0.0
    %1364 = vmatpush2.msra.mxu0 0.0
    %1365 = vmatprep.subr.mxu0 0.0
    %1366 = vmatpush2.msra.mxu0 0.0
    %1367 = vmatprep.subr.mxu0 0.0
    %1368 = vmatpush2.msra.mxu0 0.0
    %1369 = vmatprep.subr.mxu0 0.0
    %1370 = vmatpush2.msra.mxu0 0.0
    %1371 = vmatprep.mubr.f32.mxu0 0.0
    %v1372 = vand.u32 %v736, 4294901760
    %1373 = vmatmul.mubr.f32.gmra.mxu0 %v1372
    %v1374 = vpop.f32.mrf.mxu0
    %v1375 = vadd.f32 %v1288, %v1374
    %v1376 = vpop.f32.mrf.mxu0
    %1377 = vdwg.mxu0
    %v1378 = vsub.f32 %v62, %v1375
    %v1379 = vmul.f32 %v1378, %v1378
    %1380 = vmatprep.subr.mxu0 0.0
    %v1381 = vand.u32 %v78, 4294901760
    %1382 = vmatpush1.msra.mxu0 %v1381
    %1383 = vmatprep.subr.mxu0 0.0
    %v1384 = vand.u32 %v77, 4294901760
    %1385 = vmatpush1.msra.mxu0 %v1384
    %1386 = vmatprep.subr.mxu0 0.0
    %v1387 = vand.u32 %v76, 4294901760
    %1388 = vmatpush1.msra.mxu0 %v1387
    %1389 = vmatprep.subr.mxu0 0.0
    %v1390 = vand.u32 %v75, 4294901760
    %1391 = vmatpush1.msra.mxu0 %v1390
    %1392 = vmatprep.subr.mxu0 0.0
    %v1393 = vand.u32 %v74, 4294901760
    %1394 = vmatpush1.msra.mxu0 %v1393
    %1395 = vmatprep.subr.mxu0 0.0
    %v1396 = vand.u32 %v73, 4294901760
    %1397 = vmatpush1.msra.mxu0 %v1396
    %1398 = vmatprep.subr.mxu0 0.0
    %v1399 = vand.u32 %v72, 4294901760
    %1400 = vmatpush1.msra.mxu0 %v1399
    %1401 = vmatprep.subr.mxu0 0.0
    %v1402 = vand.u32 %v71, 4294901760
    %1403 = vmatpush1.msra.mxu0 %v1402
    %1404 = vmatprep.subr.mxu0 0.0
    %v1405 = vand.u32 %v70, 4294901760
    %1406 = vmatpush1.msra.mxu0 %v1405
    %1407 = vmatprep.subr.mxu0 0.0
    %v1408 = vand.u32 %v69, 4294901760
    %1409 = vmatpush1.msra.mxu0 %v1408
    %1410 = vmatprep.subr.mxu0 0.0
    %v1411 = vand.u32 %v68, 4294901760
    %1412 = vmatpush1.msra.mxu0 %v1411
    %1413 = vmatprep.subr.mxu0 0.0
    %v1414 = vand.u32 %v67, 4294901760
    %1415 = vmatpush1.msra.mxu0 %v1414
    %1416 = vmatprep.subr.mxu0 0.0
    %v1417 = vand.u32 %v66, 4294901760
    %1418 = vmatpush1.msra.mxu0 %v1417
    %1419 = vmatprep.subr.mxu0 0.0
    %v1420 = vand.u32 %v65, 4294901760
    %1421 = vmatpush1.msra.mxu0 %v1420
    %1422 = vmatprep.subr.mxu0 0.0
    %v1423 = vand.u32 %v64, 4294901760
    %1424 = vmatpush1.msra.mxu0 %v1423
    %1425 = vmatprep.subr.mxu0 0.0
    %v1426 = vand.u32 %v63, 4294901760
    %1427 = vmatpush1.msra.mxu0 %v1426
    %1428 = vmatprep.subr.mxu0 0.0
    %1429 = vmatpush2.msra.mxu0 0.0
    %1430 = vmatprep.subr.mxu0 0.0
    %1431 = vmatpush2.msra.mxu0 0.0
    %1432 = vmatprep.subr.mxu0 0.0
    %1433 = vmatpush2.msra.mxu0 0.0
    %1434 = vmatprep.subr.mxu0 0.0
    %1435 = vmatpush2.msra.mxu0 0.0
    %1436 = vmatprep.subr.mxu0 0.0
    %1437 = vmatpush2.msra.mxu0 0.0
    %1438 = vmatprep.subr.mxu0 0.0
    %1439 = vmatpush2.msra.mxu0 0.0
    %1440 = vmatprep.subr.mxu0 0.0
    %1441 = vmatpush2.msra.mxu0 0.0
    %1442 = vmatprep.subr.mxu0 0.0
    %1443 = vmatpush2.msra.mxu0 0.0
    %1444 = vmatprep.subr.mxu0 0.0
    %1445 = vmatpush2.msra.mxu0 0.0
    %1446 = vmatprep.subr.mxu0 0.0
    %1447 = vmatpush2.msra.mxu0 0.0
    %1448 = vmatprep.subr.mxu0 0.0
    %1449 = vmatpush2.msra.mxu0 0.0
    %1450 = vmatprep.subr.mxu0 0.0
    %1451 = vmatpush2.msra.mxu0 0.0
    %1452 = vmatprep.subr.mxu0 0.0
    %1453 = vmatpush2.msra.mxu0 0.0
    %1454 = vmatprep.subr.mxu0 0.0
    %1455 = vmatpush2.msra.mxu0 0.0
    %1456 = vmatprep.subr.mxu0 0.0
    %1457 = vmatpush2.msra.mxu0 0.0
    %1458 = vmatprep.subr.mxu0 0.0
    %1459 = vmatpush2.msra.mxu0 0.0
    %1460 = vmatprep.mubr.f32.mxu0 0.0
    %v1461 = vand.u32 %v1379, 4294901760
    %v1462 = vsub.f32 %v1379, %v1461
    %v1463 = vand.u32 %v1462, 4294901760
    %v1464 = vsub.f32 %v1462, %v1463
    %v1465 = vand.u32 %v1464, 4294901760
    %1466 = vmatmul.mubr.f32.gmra.mxu0 %v1465
    %v1467 = vpop.f32.mrf.mxu0
    %v1468 = vadd.f32 0.0, %v1467
    %v1469 = vpop.f32.mrf.mxu0
    %1470 = vdwg.mxu0
    %1471 = vmatprep.subr.mxu0 0.0
    %v1472 = vand.u32 %v78, 4294901760
    %v1473 = vsub.f32 %v78, %v1472
    %v1474 = vand.u32 %v1473, 4294901760
    %v1475 = vsub.f32 %v1473, %v1474
    %v1476 = vand.u32 %v1475, 4294901760
    %1477 = vmatpush1.msra.mxu0 %v1476
    %1478 = vmatprep.subr.mxu0 0.0
    %v1479 = vand.u32 %v77, 4294901760
    %v1480 = vsub.f32 %v77, %v1479
    %v1481 = vand.u32 %v1480, 4294901760
    %v1482 = vsub.f32 %v1480, %v1481
    %v1483 = vand.u32 %v1482, 4294901760
    %1484 = vmatpush1.msra.mxu0 %v1483
    %1485 = vmatprep.subr.mxu0 0.0
    %v1486 = vand.u32 %v76, 4294901760
    %v1487 = vsub.f32 %v76, %v1486
    %v1488 = vand.u32 %v1487, 4294901760
    %v1489 = vsub.f32 %v1487, %v1488
    %v1490 = vand.u32 %v1489, 4294901760
    %1491 = vmatpush1.msra.mxu0 %v1490
    %1492 = vmatprep.subr.mxu0 0.0
    %v1493 = vand.u32 %v75, 4294901760
    %v1494 = vsub.f32 %v75, %v1493
    %v1495 = vand.u32 %v1494, 4294901760
    %v1496 = vsub.f32 %v1494, %v1495
    %v1497 = vand.u32 %v1496, 4294901760
    %1498 = vmatpush1.msra.mxu0 %v1497
    %1499 = vmatprep.subr.mxu0 0.0
    %v1500 = vand.u32 %v74, 4294901760
    %v1501 = vsub.f32 %v74, %v1500
    %v1502 = vand.u32 %v1501, 4294901760
    %v1503 = vsub.f32 %v1501, %v1502
    %v1504 = vand.u32 %v1503, 4294901760
    %1505 = vmatpush1.msra.mxu0 %v1504
    %1506 = vmatprep.subr.mxu0 0.0
    %v1507 = vand.u32 %v73, 4294901760
    %v1508 = vsub.f32 %v73, %v1507
    %v1509 = vand.u32 %v1508, 4294901760
    %v1510 = vsub.f32 %v1508, %v1509
    %v1511 = vand.u32 %v1510, 4294901760
    %1512 = vmatpush1.msra.mxu0 %v1511
    %1513 = vmatprep.subr.mxu0 0.0
    %v1514 = vand.u32 %v72, 4294901760
    %v1515 = vsub.f32 %v72, %v1514
    %v1516 = vand.u32 %v1515, 4294901760
    %v1517 = vsub.f32 %v1515, %v1516
    %v1518 = vand.u32 %v1517, 4294901760
    %1519 = vmatpush1.msra.mxu0 %v1518
    %1520 = vmatprep.subr.mxu0 0.0
    %v1521 = vand.u32 %v71, 4294901760
    %v1522 = vsub.f32 %v71, %v1521
    %v1523 = vand.u32 %v1522, 4294901760
    %v1524 = vsub.f32 %v1522, %v1523
    %v1525 = vand.u32 %v1524, 4294901760
    %1526 = vmatpush1.msra.mxu0 %v1525
    %1527 = vmatprep.subr.mxu0 0.0
    %v1528 = vand.u32 %v70, 4294901760
    %v1529 = vsub.f32 %v70, %v1528
    %v1530 = vand.u32 %v1529, 4294901760
    %v1531 = vsub.f32 %v1529, %v1530
    %v1532 = vand.u32 %v1531, 4294901760
    %1533 = vmatpush1.msra.mxu0 %v1532
    %1534 = vmatprep.subr.mxu0 0.0
    %v1535 = vand.u32 %v69, 4294901760
    %v1536 = vsub.f32 %v69, %v1535
    %v1537 = vand.u32 %v1536, 4294901760
    %v1538 = vsub.f32 %v1536, %v1537
    %v1539 = vand.u32 %v1538, 4294901760
    %1540 = vmatpush1.msra.mxu0 %v1539
    %1541 = vmatprep.subr.mxu0 0.0
    %v1542 = vand.u32 %v68, 4294901760
    %v1543 = vsub.f32 %v68, %v1542
    %v1544 = vand.u32 %v1543, 4294901760
    %v1545 = vsub.f32 %v1543, %v1544
    %v1546 = vand.u32 %v1545, 4294901760
    %1547 = vmatpush1.msra.mxu0 %v1546
    %1548 = vmatprep.subr.mxu0 0.0
    %v1549 = vand.u32 %v67, 4294901760
    %v1550 = vsub.f32 %v67, %v1549
    %v1551 = vand.u32 %v1550, 4294901760
    %v1552 = vsub.f32 %v1550, %v1551
    %v1553 = vand.u32 %v1552, 4294901760
    %1554 = vmatpush1.msra.mxu0 %v1553
    %1555 = vmatprep.subr.mxu0 0.0
    %v1556 = vand.u32 %v66, 4294901760
    %v1557 = vsub.f32 %v66, %v1556
    %v1558 = vand.u32 %v1557, 4294901760
    %v1559 = vsub.f32 %v1557, %v1558
    %v1560 = vand.u32 %v1559, 4294901760
    %1561 = vmatpush1.msra.mxu0 %v1560
    %1562 = vmatprep.subr.mxu0 0.0
    %v1563 = vand.u32 %v65, 4294901760
    %v1564 = vsub.f32 %v65, %v1563
    %v1565 = vand.u32 %v1564, 4294901760
    %v1566 = vsub.f32 %v1564, %v1565
    %v1567 = vand.u32 %v1566, 4294901760
    %1568 = vmatpush1.msra.mxu0 %v1567
    %1569 = vmatprep.subr.mxu0 0.0
    %v1570 = vand.u32 %v64, 4294901760
    %v1571 = vsub.f32 %v64, %v1570
    %v1572 = vand.u32 %v1571, 4294901760
    %v1573 = vsub.f32 %v1571, %v1572
    %v1574 = vand.u32 %v1573, 4294901760
    %1575 = vmatpush1.msra.mxu0 %v1574
    %1576 = vmatprep.subr.mxu0 0.0
    %v1577 = vand.u32 %v63, 4294901760
    %v1578 = vsub.f32 %v63, %v1577
    %v1579 = vand.u32 %v1578, 4294901760
    %v1580 = vsub.f32 %v1578, %v1579
    %v1581 = vand.u32 %v1580, 4294901760
    %1582 = vmatpush1.msra.mxu0 %v1581
    %1583 = vmatprep.subr.mxu0 0.0
    %1584 = vmatpush2.msra.mxu0 0.0
    %1585 = vmatprep.subr.mxu0 0.0
    %1586 = vmatpush2.msra.mxu0 0.0
    %1587 = vmatprep.subr.mxu0 0.0
    %1588 = vmatpush2.msra.mxu0 0.0
    %1589 = vmatprep.subr.mxu0 0.0
    %1590 = vmatpush2.msra.mxu0 0.0
    %1591 = vmatprep.subr.mxu0 0.0
    %1592 = vmatpush2.msra.mxu0 0.0
    %1593 = vmatprep.subr.mxu0 0.0
    %1594 = vmatpush2.msra.mxu0 0.0
    %1595 = vmatprep.subr.mxu0 0.0
    %1596 = vmatpush2.msra.mxu0 0.0
    %1597 = vmatprep.subr.mxu0 0.0
    %1598 = vmatpush2.msra.mxu0 0.0
    %1599 = vmatprep.subr.mxu0 0.0
    %1600 = vmatpush2.msra.mxu0 0.0
    %1601 = vmatprep.subr.mxu0 0.0
    %1602 = vmatpush2.msra.mxu0 0.0
    %1603 = vmatprep.subr.mxu0 0.0
    %1604 = vmatpush2.msra.mxu0 0.0
    %1605 = vmatprep.subr.mxu0 0.0
    %1606 = vmatpush2.msra.mxu0 0.0
    %1607 = vmatprep.subr.mxu0 0.0
    %1608 = vmatpush2.msra.mxu0 0.0
    %1609 = vmatprep.subr.mxu0 0.0
    %1610 = vmatpush2.msra.mxu0 0.0
    %1611 = vmatprep.subr.mxu0 0.0
    %1612 = vmatpush2.msra.mxu0 0.0
    %1613 = vmatprep.subr.mxu0 0.0
    %1614 = vmatpush2.msra.mxu0 0.0
    %1615 = vmatprep.mubr.f32.mxu0 0.0
    %v1616 = vand.u32 %v1379, 4294901760
    %1617 = vmatmul.mubr.f32.gmra.mxu0 %v1616
    %v1618 = vpop.f32.mrf.mxu0
    %v1619 = vadd.f32 %v1468, %v1618
    %v1620 = vpop.f32.mrf.mxu0
    %1621 = vdwg.mxu0
    %1622 = vmatprep.subr.mxu0 0.0
    %v1623 = vand.u32 %v78, 4294901760
    %v1624 = vsub.f32 %v78, %v1623
    %1625 = vmatpush1.msra.mxu0 %v1624
    %1626 = vmatprep.subr.mxu0 0.0
    %v1627 = vand.u32 %v77, 4294901760
    %v1628 = vsub.f32 %v77, %v1627
    %1629 = vmatpush1.msra.mxu0 %v1628
    %1630 = vmatprep.subr.mxu0 0.0
    %v1631 = vand.u32 %v76, 4294901760
    %v1632 = vsub.f32 %v76, %v1631
    %1633 = vmatpush1.msra.mxu0 %v1632
    %1634 = vmatprep.subr.mxu0 0.0
    %v1635 = vand.u32 %v75, 4294901760
    %v1636 = vsub.f32 %v75, %v1635
    %1637 = vmatpush1.msra.mxu0 %v1636
    %1638 = vmatprep.subr.mxu0 0.0
    %v1639 = vand.u32 %v74, 4294901760
    %v1640 = vsub.f32 %v74, %v1639
    %1641 = vmatpush1.msra.mxu0 %v1640
    %1642 = vmatprep.subr.mxu0 0.0
    %v1643 = vand.u32 %v73, 4294901760
    %v1644 = vsub.f32 %v73, %v1643
    %1645 = vmatpush1.msra.mxu0 %v1644
    %1646 = vmatprep.subr.mxu0 0.0
    %v1647 = vand.u32 %v72, 4294901760
    %v1648 = vsub.f32 %v72, %v1647
    %1649 = vmatpush1.msra.mxu0 %v1648
    %1650 = vmatprep.subr.mxu0 0.0
    %v1651 = vand.u32 %v71, 4294901760
    %v1652 = vsub.f32 %v71, %v1651
    %1653 = vmatpush1.msra.mxu0 %v1652
    %1654 = vmatprep.subr.mxu0 0.0
    %v1655 = vand.u32 %v70, 4294901760
    %v1656 = vsub.f32 %v70, %v1655
    %1657 = vmatpush1.msra.mxu0 %v1656
    %1658 = vmatprep.subr.mxu0 0.0
    %v1659 = vand.u32 %v69, 4294901760
    %v1660 = vsub.f32 %v69, %v1659
    %1661 = vmatpush1.msra.mxu0 %v1660
    %1662 = vmatprep.subr.mxu0 0.0
    %v1663 = vand.u32 %v68, 4294901760
    %v1664 = vsub.f32 %v68, %v1663
    %1665 = vmatpush1.msra.mxu0 %v1664
    %1666 = vmatprep.subr.mxu0 0.0
    %v1667 = vand.u32 %v67, 4294901760
    %v1668 = vsub.f32 %v67, %v1667
    %1669 = vmatpush1.msra.mxu0 %v1668
    %1670 = vmatprep.subr.mxu0 0.0
    %v1671 = vand.u32 %v66, 4294901760
    %v1672 = vsub.f32 %v66, %v1671
    %1673 = vmatpush1.msra.mxu0 %v1672
    %1674 = vmatprep.subr.mxu0 0.0
    %v1675 = vand.u32 %v65, 4294901760
    %v1676 = vsub.f32 %v65, %v1675
    %1677 = vmatpush1.msra.mxu0 %v1676
    %1678 = vmatprep.subr.mxu0 0.0
    %v1679 = vand.u32 %v64, 4294901760
    %v1680 = vsub.f32 %v64, %v1679
    %1681 = vmatpush1.msra.mxu0 %v1680
    %1682 = vmatprep.subr.mxu0 0.0
    %v1683 = vand.u32 %v63, 4294901760
    %v1684 = vsub.f32 %v63, %v1683
    %1685 = vmatpush1.msra.mxu0 %v1684
    %1686 = vmatprep.subr.mxu0 0.0
    %1687 = vmatpush2.msra.mxu0 0.0
    %1688 = vmatprep.subr.mxu0 0.0
    %1689 = vmatpush2.msra.mxu0 0.0
    %1690 = vmatprep.subr.mxu0 0.0
    %1691 = vmatpush2.msra.mxu0 0.0
    %1692 = vmatprep.subr.mxu0 0.0
    %1693 = vmatpush2.msra.mxu0 0.0
    %1694 = vmatprep.subr.mxu0 0.0
    %1695 = vmatpush2.msra.mxu0 0.0
    %1696 = vmatprep.subr.mxu0 0.0
    %1697 = vmatpush2.msra.mxu0 0.0
    %1698 = vmatprep.subr.mxu0 0.0
    %1699 = vmatpush2.msra.mxu0 0.0
    %1700 = vmatprep.subr.mxu0 0.0
    %1701 = vmatpush2.msra.mxu0 0.0
    %1702 = vmatprep.subr.mxu0 0.0
    %1703 = vmatpush2.msra.mxu0 0.0
    %1704 = vmatprep.subr.mxu0 0.0
    %1705 = vmatpush2.msra.mxu0 0.0
    %1706 = vmatprep.subr.mxu0 0.0
    %1707 = vmatpush2.msra.mxu0 0.0
    %1708 = vmatprep.subr.mxu0 0.0
    %1709 = vmatpush2.msra.mxu0 0.0
    %1710 = vmatprep.subr.mxu0 0.0
    %1711 = vmatpush2.msra.mxu0 0.0
    %1712 = vmatprep.subr.mxu0 0.0
    %1713 = vmatpush2.msra.mxu0 0.0
    %1714 = vmatprep.subr.mxu0 0.0
    %1715 = vmatpush2.msra.mxu0 0.0
    %1716 = vmatprep.subr.mxu0 0.0
    %1717 = vmatpush2.msra.mxu0 0.0
    %1718 = vmatprep.mubr.f32.mxu0 0.0
    %v1719 = vand.u32 %v1379, 4294901760
    %v1720 = vsub.f32 %v1379, %v1719
    %1721 = vmatmul.mubr.f32.gmra.mxu0 %v1720
    %v1722 = vpop.f32.mrf.mxu0
    %v1723 = vadd.f32 %v1619, %v1722
    %v1724 = vpop.f32.mrf.mxu0
    %1725 = vdwg.mxu0
    %1726 = vmatprep.subr.mxu0 0.0
    %v1727 = vand.u32 %v78, 4294901760
    %1728 = vmatpush1.msra.mxu0 %v1727
    %1729 = vmatprep.subr.mxu0 0.0
    %v1730 = vand.u32 %v77, 4294901760
    %1731 = vmatpush1.msra.mxu0 %v1730
    %1732 = vmatprep.subr.mxu0 0.0
    %v1733 = vand.u32 %v76, 4294901760
    %1734 = vmatpush1.msra.mxu0 %v1733
    %1735 = vmatprep.subr.mxu0 0.0
    %v1736 = vand.u32 %v75, 4294901760
    %1737 = vmatpush1.msra.mxu0 %v1736
    %1738 = vmatprep.subr.mxu0 0.0
    %v1739 = vand.u32 %v74, 4294901760
    %1740 = vmatpush1.msra.mxu0 %v1739
    %1741 = vmatprep.subr.mxu0 0.0
    %v1742 = vand.u32 %v73, 4294901760
    %1743 = vmatpush1.msra.mxu0 %v1742
    %1744 = vmatprep.subr.mxu0 0.0
    %v1745 = vand.u32 %v72, 4294901760
    %1746 = vmatpush1.msra.mxu0 %v1745
    %1747 = vmatprep.subr.mxu0 0.0
    %v1748 = vand.u32 %v71, 4294901760
    %1749 = vmatpush1.msra.mxu0 %v1748
    %1750 = vmatprep.subr.mxu0 0.0
    %v1751 = vand.u32 %v70, 4294901760
    %1752 = vmatpush1.msra.mxu0 %v1751
    %1753 = vmatprep.subr.mxu0 0.0
    %v1754 = vand.u32 %v69, 4294901760
    %1755 = vmatpush1.msra.mxu0 %v1754
    %1756 = vmatprep.subr.mxu0 0.0
    %v1757 = vand.u32 %v68, 4294901760
    %1758 = vmatpush1.msra.mxu0 %v1757
    %1759 = vmatprep.subr.mxu0 0.0
    %v1760 = vand.u32 %v67, 4294901760
    %1761 = vmatpush1.msra.mxu0 %v1760
    %1762 = vmatprep.subr.mxu0 0.0
    %v1763 = vand.u32 %v66, 4294901760
    %1764 = vmatpush1.msra.mxu0 %v1763
    %1765 = vmatprep.subr.mxu0 0.0
    %v1766 = vand.u32 %v65, 4294901760
    %1767 = vmatpush1.msra.mxu0 %v1766
    %1768 = vmatprep.subr.mxu0 0.0
    %v1769 = vand.u32 %v64, 4294901760
    %1770 = vmatpush1.msra.mxu0 %v1769
    %1771 = vmatprep.subr.mxu0 0.0
    %v1772 = vand.u32 %v63, 4294901760
    %1773 = vmatpush1.msra.mxu0 %v1772
    %1774 = vmatprep.subr.mxu0 0.0
    %1775 = vmatpush2.msra.mxu0 0.0
    %1776 = vmatprep.subr.mxu0 0.0
    %1777 = vmatpush2.msra.mxu0 0.0
    %1778 = vmatprep.subr.mxu0 0.0
    %1779 = vmatpush2.msra.mxu0 0.0
    %1780 = vmatprep.subr.mxu0 0.0
    %1781 = vmatpush2.msra.mxu0 0.0
    %1782 = vmatprep.subr.mxu0 0.0
    %1783 = vmatpush2.msra.mxu0 0.0
    %1784 = vmatprep.subr.mxu0 0.0
    %1785 = vmatpush2.msra.mxu0 0.0
    %1786 = vmatprep.subr.mxu0 0.0
    %1787 = vmatpush2.msra.mxu0 0.0
    %1788 = vmatprep.subr.mxu0 0.0
    %1789 = vmatpush2.msra.mxu0 0.0
    %1790 = vmatprep.subr.mxu0 0.0
    %1791 = vmatpush2.msra.mxu0 0.0
    %1792 = vmatprep.subr.mxu0 0.0
    %1793 = vmatpush2.msra.mxu0 0.0
    %1794 = vmatprep.subr.mxu0 0.0
    %1795 = vmatpush2.msra.mxu0 0.0
    %1796 = vmatprep.subr.mxu0 0.0
    %1797 = vmatpush2.msra.mxu0 0.0
    %1798 = vmatprep.subr.mxu0 0.0
    %1799 = vmatpush2.msra.mxu0 0.0
    %1800 = vmatprep.subr.mxu0 0.0
    %1801 = vmatpush2.msra.mxu0 0.0
    %1802 = vmatprep.subr.mxu0 0.0
    %1803 = vmatpush2.msra.mxu0 0.0
    %1804 = vmatprep.subr.mxu0 0.0
    %1805 = vmatpush2.msra.mxu0 0.0
    %1806 = vmatprep.mubr.f32.mxu0 0.0
    %v1807 = vand.u32 %v1379, 4294901760
    %v1808 = vsub.f32 %v1379, %v1807
    %v1809 = vand.u32 %v1808, 4294901760
    %1810 = vmatmul.mubr.f32.gmra.mxu0 %v1809
    %v1811 = vpop.f32.mrf.mxu0
    %v1812 = vadd.f32 %v1723, %v1811
    %v1813 = vpop.f32.mrf.mxu0
    %1814 = vdwg.mxu0
    %1815 = vmatprep.subr.mxu0 0.0
    %v1816 = vand.u32 %v78, 4294901760
    %v1817 = vsub.f32 %v78, %v1816
    %v1818 = vand.u32 %v1817, 4294901760
    %1819 = vmatpush1.msra.mxu0 %v1818
    %1820 = vmatprep.subr.mxu0 0.0
    %v1821 = vand.u32 %v77, 4294901760
    %v1822 = vsub.f32 %v77, %v1821
    %v1823 = vand.u32 %v1822, 4294901760
    %1824 = vmatpush1.msra.mxu0 %v1823
    %1825 = vmatprep.subr.mxu0 0.0
    %v1826 = vand.u32 %v76, 4294901760
    %v1827 = vsub.f32 %v76, %v1826
    %v1828 = vand.u32 %v1827, 4294901760
    %1829 = vmatpush1.msra.mxu0 %v1828
    %1830 = vmatprep.subr.mxu0 0.0
    %v1831 = vand.u32 %v75, 4294901760
    %v1832 = vsub.f32 %v75, %v1831
    %v1833 = vand.u32 %v1832, 4294901760
    %1834 = vmatpush1.msra.mxu0 %v1833
    %1835 = vmatprep.subr.mxu0 0.0
    %v1836 = vand.u32 %v74, 4294901760
    %v1837 = vsub.f32 %v74, %v1836
    %v1838 = vand.u32 %v1837, 4294901760
    %1839 = vmatpush1.msra.mxu0 %v1838
    %1840 = vmatprep.subr.mxu0 0.0
    %v1841 = vand.u32 %v73, 4294901760
    %v1842 = vsub.f32 %v73, %v1841
    %v1843 = vand.u32 %v1842, 4294901760
    %1844 = vmatpush1.msra.mxu0 %v1843
    %1845 = vmatprep.subr.mxu0 0.0
    %v1846 = vand.u32 %v72, 4294901760
    %v1847 = vsub.f32 %v72, %v1846
    %v1848 = vand.u32 %v1847, 4294901760
    %1849 = vmatpush1.msra.mxu0 %v1848
    %1850 = vmatprep.subr.mxu0 0.0
    %v1851 = vand.u32 %v71, 4294901760
    %v1852 = vsub.f32 %v71, %v1851
    %v1853 = vand.u32 %v1852, 4294901760
    %1854 = vmatpush1.msra.mxu0 %v1853
    %1855 = vmatprep.subr.mxu0 0.0
    %v1856 = vand.u32 %v70, 4294901760
    %v1857 = vsub.f32 %v70, %v1856
    %v1858 = vand.u32 %v1857, 4294901760
    %1859 = vmatpush1.msra.mxu0 %v1858
    %1860 = vmatprep.subr.mxu0 0.0
    %v1861 = vand.u32 %v69, 4294901760
    %v1862 = vsub.f32 %v69, %v1861
    %v1863 = vand.u32 %v1862, 4294901760
    %1864 = vmatpush1.msra.mxu0 %v1863
    %1865 = vmatprep.subr.mxu0 0.0
    %v1866 = vand.u32 %v68, 4294901760
    %v1867 = vsub.f32 %v68, %v1866
    %v1868 = vand.u32 %v1867, 4294901760
    %1869 = vmatpush1.msra.mxu0 %v1868
    %1870 = vmatprep.subr.mxu0 0.0
    %v1871 = vand.u32 %v67, 4294901760
    %v1872 = vsub.f32 %v67, %v1871
    %v1873 = vand.u32 %v1872, 4294901760
    %1874 = vmatpush1.msra.mxu0 %v1873
    %1875 = vmatprep.subr.mxu0 0.0
    %v1876 = vand.u32 %v66, 4294901760
    %v1877 = vsub.f32 %v66, %v1876
    %v1878 = vand.u32 %v1877, 4294901760
    %1879 = vmatpush1.msra.mxu0 %v1878
    %1880 = vmatprep.subr.mxu0 0.0
    %v1881 = vand.u32 %v65, 4294901760
    %v1882 = vsub.f32 %v65, %v1881
    %v1883 = vand.u32 %v1882, 4294901760
    %1884 = vmatpush1.msra.mxu0 %v1883
    %1885 = vmatprep.subr.mxu0 0.0
    %v1886 = vand.u32 %v64, 4294901760
    %v1887 = vsub.f32 %v64, %v1886
    %v1888 = vand.u32 %v1887, 4294901760
    %1889 = vmatpush1.msra.mxu0 %v1888
    %1890 = vmatprep.subr.mxu0 0.0
    %v1891 = vand.u32 %v63, 4294901760
    %v1892 = vsub.f32 %v63, %v1891
    %v1893 = vand.u32 %v1892, 4294901760
    %1894 = vmatpush1.msra.mxu0 %v1893
    %1895 = vmatprep.subr.mxu0 0.0
    %1896 = vmatpush2.msra.mxu0 0.0
    %1897 = vmatprep.subr.mxu0 0.0
    %1898 = vmatpush2.msra.mxu0 0.0
    %1899 = vmatprep.subr.mxu0 0.0
    %1900 = vmatpush2.msra.mxu0 0.0
    %1901 = vmatprep.subr.mxu0 0.0
    %1902 = vmatpush2.msra.mxu0 0.0
    %1903 = vmatprep.subr.mxu0 0.0
    %1904 = vmatpush2.msra.mxu0 0.0
    %1905 = vmatprep.subr.mxu0 0.0
    %1906 = vmatpush2.msra.mxu0 0.0
    %1907 = vmatprep.subr.mxu0 0.0
    %1908 = vmatpush2.msra.mxu0 0.0
    %1909 = vmatprep.subr.mxu0 0.0
    %1910 = vmatpush2.msra.mxu0 0.0
    %1911 = vmatprep.subr.mxu0 0.0
    %1912 = vmatpush2.msra.mxu0 0.0
    %1913 = vmatprep.subr.mxu0 0.0
    %1914 = vmatpush2.msra.mxu0 0.0
    %1915 = vmatprep.subr.mxu0 0.0
    %1916 = vmatpush2.msra.mxu0 0.0
    %1917 = vmatprep.subr.mxu0 0.0
    %1918 = vmatpush2.msra.mxu0 0.0
    %1919 = vmatprep.subr.mxu0 0.0
    %1920 = vmatpush2.msra.mxu0 0.0
    %1921 = vmatprep.subr.mxu0 0.0
    %1922 = vmatpush2.msra.mxu0 0.0
    %1923 = vmatprep.subr.mxu0 0.0
    %1924 = vmatpush2.msra.mxu0 0.0
    %1925 = vmatprep.subr.mxu0 0.0
    %1926 = vmatpush2.msra.mxu0 0.0
    %1927 = vmatprep.mubr.f32.mxu0 0.0
    %v1928 = vand.u32 %v1379, 4294901760
    %1929 = vmatmul.mubr.f32.gmra.mxu0 %v1928
    %v1930 = vpop.f32.mrf.mxu0
    %v1931 = vadd.f32 %v1812, %v1930
    %v1932 = vpop.f32.mrf.mxu0
    %1933 = vdwg.mxu0
    %1934 = vmatprep.subr.mxu0 0.0
    %v1935 = vand.u32 %v78, 4294901760
    %1936 = vmatpush1.msra.mxu0 %v1935
    %1937 = vmatprep.subr.mxu0 0.0
    %v1938 = vand.u32 %v77, 4294901760
    %1939 = vmatpush1.msra.mxu0 %v1938
    %1940 = vmatprep.subr.mxu0 0.0
    %v1941 = vand.u32 %v76, 4294901760
    %1942 = vmatpush1.msra.mxu0 %v1941
    %1943 = vmatprep.subr.mxu0 0.0
    %v1944 = vand.u32 %v75, 4294901760
    %1945 = vmatpush1.msra.mxu0 %v1944
    %1946 = vmatprep.subr.mxu0 0.0
    %v1947 = vand.u32 %v74, 4294901760
    %1948 = vmatpush1.msra.mxu0 %v1947
    %1949 = vmatprep.subr.mxu0 0.0
    %v1950 = vand.u32 %v73, 4294901760
    %1951 = vmatpush1.msra.mxu0 %v1950
    %1952 = vmatprep.subr.mxu0 0.0
    %v1953 = vand.u32 %v72, 4294901760
    %1954 = vmatpush1.msra.mxu0 %v1953
    %1955 = vmatprep.subr.mxu0 0.0
    %v1956 = vand.u32 %v71, 4294901760
    %1957 = vmatpush1.msra.mxu0 %v1956
    %1958 = vmatprep.subr.mxu0 0.0
    %v1959 = vand.u32 %v70, 4294901760
    %1960 = vmatpush1.msra.mxu0 %v1959
    %1961 = vmatprep.subr.mxu0 0.0
    %v1962 = vand.u32 %v69, 4294901760
    %1963 = vmatpush1.msra.mxu0 %v1962
    %1964 = vmatprep.subr.mxu0 0.0
    %v1965 = vand.u32 %v68, 4294901760
    %1966 = vmatpush1.msra.mxu0 %v1965
    %1967 = vmatprep.subr.mxu0 0.0
    %v1968 = vand.u32 %v67, 4294901760
    %1969 = vmatpush1.msra.mxu0 %v1968
    %1970 = vmatprep.subr.mxu0 0.0
    %v1971 = vand.u32 %v66, 4294901760
    %1972 = vmatpush1.msra.mxu0 %v1971
    %1973 = vmatprep.subr.mxu0 0.0
    %v1974 = vand.u32 %v65, 4294901760
    %1975 = vmatpush1.msra.mxu0 %v1974
    %1976 = vmatprep.subr.mxu0 0.0
    %v1977 = vand.u32 %v64, 4294901760
    %1978 = vmatpush1.msra.mxu0 %v1977
    %1979 = vmatprep.subr.mxu0 0.0
    %v1980 = vand.u32 %v63, 4294901760
    %1981 = vmatpush1.msra.mxu0 %v1980
    %1982 = vmatprep.subr.mxu0 0.0
    %1983 = vmatpush2.msra.mxu0 0.0
    %1984 = vmatprep.subr.mxu0 0.0
    %1985 = vmatpush2.msra.mxu0 0.0
    %1986 = vmatprep.subr.mxu0 0.0
    %1987 = vmatpush2.msra.mxu0 0.0
    %1988 = vmatprep.subr.mxu0 0.0
    %1989 = vmatpush2.msra.mxu0 0.0
    %1990 = vmatprep.subr.mxu0 0.0
    %1991 = vmatpush2.msra.mxu0 0.0
    %1992 = vmatprep.subr.mxu0 0.0
    %1993 = vmatpush2.msra.mxu0 0.0
    %1994 = vmatprep.subr.mxu0 0.0
    %1995 = vmatpush2.msra.mxu0 0.0
    %1996 = vmatprep.subr.mxu0 0.0
    %1997 = vmatpush2.msra.mxu0 0.0
    %1998 = vmatprep.subr.mxu0 0.0
    %1999 = vmatpush2.msra.mxu0 0.0
    %2000 = vmatprep.subr.mxu0 0.0
    %2001 = vmatpush2.msra.mxu0 0.0
    %2002 = vmatprep.subr.mxu0 0.0
    %2003 = vmatpush2.msra.mxu0 0.0
    %2004 = vmatprep.subr.mxu0 0.0
    %2005 = vmatpush2.msra.mxu0 0.0
    %2006 = vmatprep.subr.mxu0 0.0
    %2007 = vmatpush2.msra.mxu0 0.0
    %2008 = vmatprep.subr.mxu0 0.0
    %2009 = vmatpush2.msra.mxu0 0.0
    %2010 = vmatprep.subr.mxu0 0.0
    %2011 = vmatpush2.msra.mxu0 0.0
    %2012 = vmatprep.subr.mxu0 0.0
    %2013 = vmatpush2.msra.mxu0 0.0
    %2014 = vmatprep.mubr.f32.mxu0 0.0
    %v2015 = vand.u32 %v1379, 4294901760
    %2016 = vmatmul.mubr.f32.gmra.mxu0 %v2015
    %v2017 = vpop.f32.mrf.mxu0
    %v2018 = vadd.f32 %v1931, %v2017
    %v2019 = vpop.f32.mrf.mxu0
    %2020 = vdwg.mxu0
    %v2021 = vmul.f32 %v2018, 0.032258064
    %v2022 = vrsqrt.pop %v2021
    %v2023 = vmul.f32 %v2021, %v2022
    %vm2024 = vcmp.eq.f32.partialorder %v2021, inf
    %v2025 = vsel %vm2024, %v2021, %v2023
    %vm2026 = vcmp.eq.f32.partialorder %v2021, 0.0
    %v2027 = vand.u32 %v2021, 2147483648
    %v2028 = vsel %vm2026, %v2027, %v2025
    %v2029 = vadd.f32 %v2028, 1e-06
    %vm2030 = vcmp.gt.f32.partialorder %v2029, 0.0
    %v2031 = vsel %vm2030, %v2029, 1.0
    %v2032 = vrcp.pop %v2031
    %2033 = vmatprep.subr.mxu0 0.0
    %v2034 = vand.u32 %v94, 4294901760
    %2035 = vmatpush1.msra.mxu0 %v2034
    %2036 = vmatprep.subr.mxu0 0.0
    %v2037 = vand.u32 %v93, 4294901760
    %2038 = vmatpush1.msra.mxu0 %v2037
    %2039 = vmatprep.subr.mxu0 0.0
    %v2040 = vand.u32 %v92, 4294901760
    %2041 = vmatpush1.msra.mxu0 %v2040
    %2042 = vmatprep.subr.mxu0 0.0
    %v2043 = vand.u32 %v91, 4294901760
    %2044 = vmatpush1.msra.mxu0 %v2043
    %2045 = vmatprep.subr.mxu0 0.0
    %v2046 = vand.u32 %v90, 4294901760
    %2047 = vmatpush1.msra.mxu0 %v2046
    %2048 = vmatprep.subr.mxu0 0.0
    %v2049 = vand.u32 %v89, 4294901760
    %2050 = vmatpush1.msra.mxu0 %v2049
    %2051 = vmatprep.subr.mxu0 0.0
    %v2052 = vand.u32 %v88, 4294901760
    %2053 = vmatpush1.msra.mxu0 %v2052
    %2054 = vmatprep.subr.mxu0 0.0
    %v2055 = vand.u32 %v87, 4294901760
    %2056 = vmatpush1.msra.mxu0 %v2055
    %2057 = vmatprep.subr.mxu0 0.0
    %v2058 = vand.u32 %v86, 4294901760
    %2059 = vmatpush1.msra.mxu0 %v2058
    %2060 = vmatprep.subr.mxu0 0.0
    %v2061 = vand.u32 %v85, 4294901760
    %2062 = vmatpush1.msra.mxu0 %v2061
    %2063 = vmatprep.subr.mxu0 0.0
    %v2064 = vand.u32 %v84, 4294901760
    %2065 = vmatpush1.msra.mxu0 %v2064
    %2066 = vmatprep.subr.mxu0 0.0
    %v2067 = vand.u32 %v83, 4294901760
    %2068 = vmatpush1.msra.mxu0 %v2067
    %2069 = vmatprep.subr.mxu0 0.0
    %v2070 = vand.u32 %v82, 4294901760
    %2071 = vmatpush1.msra.mxu0 %v2070
    %2072 = vmatprep.subr.mxu0 0.0
    %v2073 = vand.u32 %v81, 4294901760
    %2074 = vmatpush1.msra.mxu0 %v2073
    %2075 = vmatprep.subr.mxu0 0.0
    %v2076 = vand.u32 %v80, 4294901760
    %2077 = vmatpush1.msra.mxu0 %v2076
    %2078 = vmatprep.subr.mxu0 0.0
    %v2079 = vand.u32 %v79, 4294901760
    %2080 = vmatpush1.msra.mxu0 %v2079
    %2081 = vmatprep.subr.mxu0 0.0
    %2082 = vmatpush2.msra.mxu0 0.0
    %2083 = vmatprep.subr.mxu0 0.0
    %2084 = vmatpush2.msra.mxu0 0.0
    %2085 = vmatprep.subr.mxu0 0.0
    %2086 = vmatpush2.msra.mxu0 0.0
    %2087 = vmatprep.subr.mxu0 0.0
    %2088 = vmatpush2.msra.mxu0 0.0
    %2089 = vmatprep.subr.mxu0 0.0
    %2090 = vmatpush2.msra.mxu0 0.0
    %2091 = vmatprep.subr.mxu0 0.0
    %2092 = vmatpush2.msra.mxu0 0.0
    %2093 = vmatprep.subr.mxu0 0.0
    %2094 = vmatpush2.msra.mxu0 0.0
    %2095 = vmatprep.subr.mxu0 0.0
    %2096 = vmatpush2.msra.mxu0 0.0
    %2097 = vmatprep.subr.mxu0 0.0
    %2098 = vmatpush2.msra.mxu0 0.0
    %2099 = vmatprep.subr.mxu0 0.0
    %2100 = vmatpush2.msra.mxu0 0.0
    %2101 = vmatprep.subr.mxu0 0.0
    %2102 = vmatpush2.msra.mxu0 0.0
    %2103 = vmatprep.subr.mxu0 0.0
    %2104 = vmatpush2.msra.mxu0 0.0
    %2105 = vmatprep.subr.mxu0 0.0
    %2106 = vmatpush2.msra.mxu0 0.0
    %2107 = vmatprep.subr.mxu0 0.0
    %2108 = vmatpush2.msra.mxu0 0.0
    %2109 = vmatprep.subr.mxu0 0.0
    %2110 = vmatpush2.msra.mxu0 0.0
    %2111 = vmatprep.subr.mxu0 0.0
    %2112 = vmatpush2.msra.mxu0 0.0
    %2113 = vmatprep.mubr.f32.mxu0 0.0
    %v2114 = vand.u32 %v2032, 4294901760
    %v2115 = vsub.f32 %v2032, %v2114
    %v2116 = vand.u32 %v2115, 4294901760
    %v2117 = vsub.f32 %v2115, %v2116
    %v2118 = vand.u32 %v2117, 4294901760
    %2119 = vmatmul.mubr.f32.gmra.mxu0 %v2118
    %v2120 = vpop.f32.mrf.mxu0
    %v2121 = vadd.f32 0.0, %v2120
    %v2122 = vpop.f32.mrf.mxu0
    %2123 = vdwg.mxu0
    %2124 = vmatprep.subr.mxu0 0.0
    %v2125 = vand.u32 %v94, 4294901760
    %v2126 = vsub.f32 %v94, %v2125
    %v2127 = vand.u32 %v2126, 4294901760
    %v2128 = vsub.f32 %v2126, %v2127
    %v2129 = vand.u32 %v2128, 4294901760
    %2130 = vmatpush1.msra.mxu0 %v2129
    %2131 = vmatprep.subr.mxu0 0.0
    %v2132 = vand.u32 %v93, 4294901760
    %v2133 = vsub.f32 %v93, %v2132
    %v2134 = vand.u32 %v2133, 4294901760
    %v2135 = vsub.f32 %v2133, %v2134
    %v2136 = vand.u32 %v2135, 4294901760
    %2137 = vmatpush1.msra.mxu0 %v2136
    %2138 = vmatprep.subr.mxu0 0.0
    %v2139 = vand.u32 %v92, 4294901760
    %v2140 = vsub.f32 %v92, %v2139
    %v2141 = vand.u32 %v2140, 4294901760
    %v2142 = vsub.f32 %v2140, %v2141
    %v2143 = vand.u32 %v2142, 4294901760
    %2144 = vmatpush1.msra.mxu0 %v2143
    %2145 = vmatprep.subr.mxu0 0.0
    %v2146 = vand.u32 %v91, 4294901760
    %v2147 = vsub.f32 %v91, %v2146
    %v2148 = vand.u32 %v2147, 4294901760
    %v2149 = vsub.f32 %v2147, %v2148
    %v2150 = vand.u32 %v2149, 4294901760
    %2151 = vmatpush1.msra.mxu0 %v2150
    %2152 = vmatprep.subr.mxu0 0.0
    %v2153 = vand.u32 %v90, 4294901760
    %v2154 = vsub.f32 %v90, %v2153
    %v2155 = vand.u32 %v2154, 4294901760
    %v2156 = vsub.f32 %v2154, %v2155
    %v2157 = vand.u32 %v2156, 4294901760
    %2158 = vmatpush1.msra.mxu0 %v2157
    %2159 = vmatprep.subr.mxu0 0.0
    %v2160 = vand.u32 %v89, 4294901760
    %v2161 = vsub.f32 %v89, %v2160
    %v2162 = vand.u32 %v2161, 4294901760
    %v2163 = vsub.f32 %v2161, %v2162
    %v2164 = vand.u32 %v2163, 4294901760
    %2165 = vmatpush1.msra.mxu0 %v2164
    %2166 = vmatprep.subr.mxu0 0.0
    %v2167 = vand.u32 %v88, 4294901760
    %v2168 = vsub.f32 %v88, %v2167
    %v2169 = vand.u32 %v2168, 4294901760
    %v2170 = vsub.f32 %v2168, %v2169
    %v2171 = vand.u32 %v2170, 4294901760
    %2172 = vmatpush1.msra.mxu0 %v2171
    %2173 = vmatprep.subr.mxu0 0.0
    %v2174 = vand.u32 %v87, 4294901760
    %v2175 = vsub.f32 %v87, %v2174
    %v2176 = vand.u32 %v2175, 4294901760
    %v2177 = vsub.f32 %v2175, %v2176
    %v2178 = vand.u32 %v2177, 4294901760
    %2179 = vmatpush1.msra.mxu0 %v2178
    %2180 = vmatprep.subr.mxu0 0.0
    %v2181 = vand.u32 %v86, 4294901760
    %v2182 = vsub.f32 %v86, %v2181
    %v2183 = vand.u32 %v2182, 4294901760
    %v2184 = vsub.f32 %v2182, %v2183
    %v2185 = vand.u32 %v2184, 4294901760
    %2186 = vmatpush1.msra.mxu0 %v2185
    %2187 = vmatprep.subr.mxu0 0.0
    %v2188 = vand.u32 %v85, 4294901760
    %v2189 = vsub.f32 %v85, %v2188
    %v2190 = vand.u32 %v2189, 4294901760
    %v2191 = vsub.f32 %v2189, %v2190
    %v2192 = vand.u32 %v2191, 4294901760
    %2193 = vmatpush1.msra.mxu0 %v2192
    %2194 = vmatprep.subr.mxu0 0.0
    %v2195 = vand.u32 %v84, 4294901760
    %v2196 = vsub.f32 %v84, %v2195
    %v2197 = vand.u32 %v2196, 4294901760
    %v2198 = vsub.f32 %v2196, %v2197
    %v2199 = vand.u32 %v2198, 4294901760
    %2200 = vmatpush1.msra.mxu0 %v2199
    %2201 = vmatprep.subr.mxu0 0.0
    %v2202 = vand.u32 %v83, 4294901760
    %v2203 = vsub.f32 %v83, %v2202
    %v2204 = vand.u32 %v2203, 4294901760
    %v2205 = vsub.f32 %v2203, %v2204
    %v2206 = vand.u32 %v2205, 4294901760
    %2207 = vmatpush1.msra.mxu0 %v2206
    %2208 = vmatprep.subr.mxu0 0.0
    %v2209 = vand.u32 %v82, 4294901760
    %v2210 = vsub.f32 %v82, %v2209
    %v2211 = vand.u32 %v2210, 4294901760
    %v2212 = vsub.f32 %v2210, %v2211
    %v2213 = vand.u32 %v2212, 4294901760
    %2214 = vmatpush1.msra.mxu0 %v2213
    %2215 = vmatprep.subr.mxu0 0.0
    %v2216 = vand.u32 %v81, 4294901760
    %v2217 = vsub.f32 %v81, %v2216
    %v2218 = vand.u32 %v2217, 4294901760
    %v2219 = vsub.f32 %v2217, %v2218
    %v2220 = vand.u32 %v2219, 4294901760
    %2221 = vmatpush1.msra.mxu0 %v2220
    %2222 = vmatprep.subr.mxu0 0.0
    %v2223 = vand.u32 %v80, 4294901760
    %v2224 = vsub.f32 %v80, %v2223
    %v2225 = vand.u32 %v2224, 4294901760
    %v2226 = vsub.f32 %v2224, %v2225
    %v2227 = vand.u32 %v2226, 4294901760
    %2228 = vmatpush1.msra.mxu0 %v2227
    %2229 = vmatprep.subr.mxu0 0.0
    %v2230 = vand.u32 %v79, 4294901760
    %v2231 = vsub.f32 %v79, %v2230
    %v2232 = vand.u32 %v2231, 4294901760
    %v2233 = vsub.f32 %v2231, %v2232
    %v2234 = vand.u32 %v2233, 4294901760
    %2235 = vmatpush1.msra.mxu0 %v2234
    %2236 = vmatprep.subr.mxu0 0.0
    %2237 = vmatpush2.msra.mxu0 0.0
    %2238 = vmatprep.subr.mxu0 0.0
    %2239 = vmatpush2.msra.mxu0 0.0
    %2240 = vmatprep.subr.mxu0 0.0
    %2241 = vmatpush2.msra.mxu0 0.0
    %2242 = vmatprep.subr.mxu0 0.0
    %2243 = vmatpush2.msra.mxu0 0.0
    %2244 = vmatprep.subr.mxu0 0.0
    %2245 = vmatpush2.msra.mxu0 0.0
    %2246 = vmatprep.subr.mxu0 0.0
    %2247 = vmatpush2.msra.mxu0 0.0
    %2248 = vmatprep.subr.mxu0 0.0
    %2249 = vmatpush2.msra.mxu0 0.0
    %2250 = vmatprep.subr.mxu0 0.0
    %2251 = vmatpush2.msra.mxu0 0.0
    %2252 = vmatprep.subr.mxu0 0.0
    %2253 = vmatpush2.msra.mxu0 0.0
    %2254 = vmatprep.subr.mxu0 0.0
    %2255 = vmatpush2.msra.mxu0 0.0
    %2256 = vmatprep.subr.mxu0 0.0
    %2257 = vmatpush2.msra.mxu0 0.0
    %2258 = vmatprep.subr.mxu0 0.0
    %2259 = vmatpush2.msra.mxu0 0.0
    %2260 = vmatprep.subr.mxu0 0.0
    %2261 = vmatpush2.msra.mxu0 0.0
    %2262 = vmatprep.subr.mxu0 0.0
    %2263 = vmatpush2.msra.mxu0 0.0
    %2264 = vmatprep.subr.mxu0 0.0
    %2265 = vmatpush2.msra.mxu0 0.0
    %2266 = vmatprep.subr.mxu0 0.0
    %2267 = vmatpush2.msra.mxu0 0.0
    %2268 = vmatprep.mubr.f32.mxu0 0.0
    %v2269 = vand.u32 %v2032, 4294901760
    %2270 = vmatmul.mubr.f32.gmra.mxu0 %v2269
    %v2271 = vpop.f32.mrf.mxu0
    %v2272 = vadd.f32 %v2121, %v2271
    %v2273 = vpop.f32.mrf.mxu0
    %2274 = vdwg.mxu0
    %2275 = vmatprep.subr.mxu0 0.0
    %v2276 = vand.u32 %v94, 4294901760
    %v2277 = vsub.f32 %v94, %v2276
    %2278 = vmatpush1.msra.mxu0 %v2277
    %2279 = vmatprep.subr.mxu0 0.0
    %v2280 = vand.u32 %v93, 4294901760
    %v2281 = vsub.f32 %v93, %v2280
    %2282 = vmatpush1.msra.mxu0 %v2281
    %2283 = vmatprep.subr.mxu0 0.0
    %v2284 = vand.u32 %v92, 4294901760
    %v2285 = vsub.f32 %v92, %v2284
    %2286 = vmatpush1.msra.mxu0 %v2285
    %2287 = vmatprep.subr.mxu0 0.0
    %v2288 = vand.u32 %v91, 4294901760
    %v2289 = vsub.f32 %v91, %v2288
    %2290 = vmatpush1.msra.mxu0 %v2289
    %2291 = vmatprep.subr.mxu0 0.0
    %v2292 = vand.u32 %v90, 4294901760
    %v2293 = vsub.f32 %v90, %v2292
    %2294 = vmatpush1.msra.mxu0 %v2293
    %2295 = vmatprep.subr.mxu0 0.0
    %v2296 = vand.u32 %v89, 4294901760
    %v2297 = vsub.f32 %v89, %v2296
    %2298 = vmatpush1.msra.mxu0 %v2297
    %2299 = vmatprep.subr.mxu0 0.0
    %v2300 = vand.u32 %v88, 4294901760
    %v2301 = vsub.f32 %v88, %v2300
    %2302 = vmatpush1.msra.mxu0 %v2301
    %2303 = vmatprep.subr.mxu0 0.0
    %v2304 = vand.u32 %v87, 4294901760
    %v2305 = vsub.f32 %v87, %v2304
    %2306 = vmatpush1.msra.mxu0 %v2305
    %2307 = vmatprep.subr.mxu0 0.0
    %v2308 = vand.u32 %v86, 4294901760
    %v2309 = vsub.f32 %v86, %v2308
    %2310 = vmatpush1.msra.mxu0 %v2309
    %2311 = vmatprep.subr.mxu0 0.0
    %v2312 = vand.u32 %v85, 4294901760
    %v2313 = vsub.f32 %v85, %v2312
    %2314 = vmatpush1.msra.mxu0 %v2313
    %2315 = vmatprep.subr.mxu0 0.0
    %v2316 = vand.u32 %v84, 4294901760
    %v2317 = vsub.f32 %v84, %v2316
    %2318 = vmatpush1.msra.mxu0 %v2317
    %2319 = vmatprep.subr.mxu0 0.0
    %v2320 = vand.u32 %v83, 4294901760
    %v2321 = vsub.f32 %v83, %v2320
    %2322 = vmatpush1.msra.mxu0 %v2321
    %2323 = vmatprep.subr.mxu0 0.0
    %v2324 = vand.u32 %v82, 4294901760
    %v2325 = vsub.f32 %v82, %v2324
    %2326 = vmatpush1.msra.mxu0 %v2325
    %2327 = vmatprep.subr.mxu0 0.0
    %v2328 = vand.u32 %v81, 4294901760
    %v2329 = vsub.f32 %v81, %v2328
    %2330 = vmatpush1.msra.mxu0 %v2329
    %2331 = vmatprep.subr.mxu0 0.0
    %v2332 = vand.u32 %v80, 4294901760
    %v2333 = vsub.f32 %v80, %v2332
    %2334 = vmatpush1.msra.mxu0 %v2333
    %2335 = vmatprep.subr.mxu0 0.0
    %v2336 = vand.u32 %v79, 4294901760
    %v2337 = vsub.f32 %v79, %v2336
    %2338 = vmatpush1.msra.mxu0 %v2337
    %2339 = vmatprep.subr.mxu0 0.0
    %2340 = vmatpush2.msra.mxu0 0.0
    %2341 = vmatprep.subr.mxu0 0.0
    %2342 = vmatpush2.msra.mxu0 0.0
    %2343 = vmatprep.subr.mxu0 0.0
    %2344 = vmatpush2.msra.mxu0 0.0
    %2345 = vmatprep.subr.mxu0 0.0
    %2346 = vmatpush2.msra.mxu0 0.0
    %2347 = vmatprep.subr.mxu0 0.0
    %2348 = vmatpush2.msra.mxu0 0.0
    %2349 = vmatprep.subr.mxu0 0.0
    %2350 = vmatpush2.msra.mxu0 0.0
    %2351 = vmatprep.subr.mxu0 0.0
    %2352 = vmatpush2.msra.mxu0 0.0
    %2353 = vmatprep.subr.mxu0 0.0
    %2354 = vmatpush2.msra.mxu0 0.0
    %2355 = vmatprep.subr.mxu0 0.0
    %2356 = vmatpush2.msra.mxu0 0.0
    %2357 = vmatprep.subr.mxu0 0.0
    %2358 = vmatpush2.msra.mxu0 0.0
    %2359 = vmatprep.subr.mxu0 0.0
    %2360 = vmatpush2.msra.mxu0 0.0
    %2361 = vmatprep.subr.mxu0 0.0
    %2362 = vmatpush2.msra.mxu0 0.0
    %2363 = vmatprep.subr.mxu0 0.0
    %2364 = vmatpush2.msra.mxu0 0.0
    %2365 = vmatprep.subr.mxu0 0.0
    %2366 = vmatpush2.msra.mxu0 0.0
    %2367 = vmatprep.subr.mxu0 0.0
    %2368 = vmatpush2.msra.mxu0 0.0
    %2369 = vmatprep.subr.mxu0 0.0
    %2370 = vmatpush2.msra.mxu0 0.0
    %2371 = vmatprep.mubr.f32.mxu0 0.0
    %v2372 = vand.u32 %v2032, 4294901760
    %v2373 = vsub.f32 %v2032, %v2372
    %2374 = vmatmul.mubr.f32.gmra.mxu0 %v2373
    %v2375 = vpop.f32.mrf.mxu0
    %v2376 = vadd.f32 %v2272, %v2375
    %v2377 = vpop.f32.mrf.mxu0
    %2378 = vdwg.mxu0
    %2379 = vmatprep.subr.mxu0 0.0
    %v2380 = vand.u32 %v94, 4294901760
    %2381 = vmatpush1.msra.mxu0 %v2380
    %2382 = vmatprep.subr.mxu0 0.0
    %v2383 = vand.u32 %v93, 4294901760
    %2384 = vmatpush1.msra.mxu0 %v2383
    %2385 = vmatprep.subr.mxu0 0.0
    %v2386 = vand.u32 %v92, 4294901760
    %2387 = vmatpush1.msra.mxu0 %v2386
    %2388 = vmatprep.subr.mxu0 0.0
    %v2389 = vand.u32 %v91, 4294901760
    %2390 = vmatpush1.msra.mxu0 %v2389
    %2391 = vmatprep.subr.mxu0 0.0
    %v2392 = vand.u32 %v90, 4294901760
    %2393 = vmatpush1.msra.mxu0 %v2392
    %2394 = vmatprep.subr.mxu0 0.0
    %v2395 = vand.u32 %v89, 4294901760
    %2396 = vmatpush1.msra.mxu0 %v2395
    %2397 = vmatprep.subr.mxu0 0.0
    %v2398 = vand.u32 %v88, 4294901760
    %2399 = vmatpush1.msra.mxu0 %v2398
    %2400 = vmatprep.subr.mxu0 0.0
    %v2401 = vand.u32 %v87, 4294901760
    %2402 = vmatpush1.msra.mxu0 %v2401
    %2403 = vmatprep.subr.mxu0 0.0
    %v2404 = vand.u32 %v86, 4294901760
    %2405 = vmatpush1.msra.mxu0 %v2404
    %2406 = vmatprep.subr.mxu0 0.0
    %v2407 = vand.u32 %v85, 4294901760
    %2408 = vmatpush1.msra.mxu0 %v2407
    %2409 = vmatprep.subr.mxu0 0.0
    %v2410 = vand.u32 %v84, 4294901760
    %2411 = vmatpush1.msra.mxu0 %v2410
    %2412 = vmatprep.subr.mxu0 0.0
    %v2413 = vand.u32 %v83, 4294901760
    %2414 = vmatpush1.msra.mxu0 %v2413
    %2415 = vmatprep.subr.mxu0 0.0
    %v2416 = vand.u32 %v82, 4294901760
    %2417 = vmatpush1.msra.mxu0 %v2416
    %2418 = vmatprep.subr.mxu0 0.0
    %v2419 = vand.u32 %v81, 4294901760
    %2420 = vmatpush1.msra.mxu0 %v2419
    %2421 = vmatprep.subr.mxu0 0.0
    %v2422 = vand.u32 %v80, 4294901760
    %2423 = vmatpush1.msra.mxu0 %v2422
    %2424 = vmatprep.subr.mxu0 0.0
    %v2425 = vand.u32 %v79, 4294901760
    %2426 = vmatpush1.msra.mxu0 %v2425
    %2427 = vmatprep.subr.mxu0 0.0
    %2428 = vmatpush2.msra.mxu0 0.0
    %2429 = vmatprep.subr.mxu0 0.0
    %2430 = vmatpush2.msra.mxu0 0.0
    %2431 = vmatprep.subr.mxu0 0.0
    %2432 = vmatpush2.msra.mxu0 0.0
    %2433 = vmatprep.subr.mxu0 0.0
    %2434 = vmatpush2.msra.mxu0 0.0
    %2435 = vmatprep.subr.mxu0 0.0
    %2436 = vmatpush2.msra.mxu0 0.0
    %2437 = vmatprep.subr.mxu0 0.0
    %2438 = vmatpush2.msra.mxu0 0.0
    %2439 = vmatprep.subr.mxu0 0.0
    %2440 = vmatpush2.msra.mxu0 0.0
    %2441 = vmatprep.subr.mxu0 0.0
    %2442 = vmatpush2.msra.mxu0 0.0
    %2443 = vmatprep.subr.mxu0 0.0
    %2444 = vmatpush2.msra.mxu0 0.0
    %2445 = vmatprep.subr.mxu0 0.0
    %2446 = vmatpush2.msra.mxu0 0.0
    %2447 = vmatprep.subr.mxu0 0.0
    %2448 = vmatpush2.msra.mxu0 0.0
    %2449 = vmatprep.subr.mxu0 0.0
    %2450 = vmatpush2.msra.mxu0 0.0
    %2451 = vmatprep.subr.mxu0 0.0
    %2452 = vmatpush2.msra.mxu0 0.0
    %2453 = vmatprep.subr.mxu0 0.0
    %2454 = vmatpush2.msra.mxu0 0.0
    %2455 = vmatprep.subr.mxu0 0.0
    %2456 = vmatpush2.msra.mxu0 0.0
    %2457 = vmatprep.subr.mxu0 0.0
    %2458 = vmatpush2.msra.mxu0 0.0
    %2459 = vmatprep.mubr.f32.mxu0 0.0
    %v2460 = vand.u32 %v2032, 4294901760
    %v2461 = vsub.f32 %v2032, %v2460
    %v2462 = vand.u32 %v2461, 4294901760
    %2463 = vmatmul.mubr.f32.gmra.mxu0 %v2462
    %v2464 = vpop.f32.mrf.mxu0
    %v2465 = vadd.f32 %v2376, %v2464
    %v2466 = vpop.f32.mrf.mxu0
    %2467 = vdwg.mxu0
    %2468 = vmatprep.subr.mxu0 0.0
    %v2469 = vand.u32 %v94, 4294901760
    %v2470 = vsub.f32 %v94, %v2469
    %v2471 = vand.u32 %v2470, 4294901760
    %2472 = vmatpush1.msra.mxu0 %v2471
    %2473 = vmatprep.subr.mxu0 0.0
    %v2474 = vand.u32 %v93, 4294901760
    %v2475 = vsub.f32 %v93, %v2474
    %v2476 = vand.u32 %v2475, 4294901760
    %2477 = vmatpush1.msra.mxu0 %v2476
    %2478 = vmatprep.subr.mxu0 0.0
    %v2479 = vand.u32 %v92, 4294901760
    %v2480 = vsub.f32 %v92, %v2479
    %v2481 = vand.u32 %v2480, 4294901760
    %2482 = vmatpush1.msra.mxu0 %v2481
    %2483 = vmatprep.subr.mxu0 0.0
    %v2484 = vand.u32 %v91, 4294901760
    %v2485 = vsub.f32 %v91, %v2484
    %v2486 = vand.u32 %v2485, 4294901760
    %2487 = vmatpush1.msra.mxu0 %v2486
    %2488 = vmatprep.subr.mxu0 0.0
    %v2489 = vand.u32 %v90, 4294901760
    %v2490 = vsub.f32 %v90, %v2489
    %v2491 = vand.u32 %v2490, 4294901760
    %2492 = vmatpush1.msra.mxu0 %v2491
    %2493 = vmatprep.subr.mxu0 0.0
    %v2494 = vand.u32 %v89, 4294901760
    %v2495 = vsub.f32 %v89, %v2494
    %v2496 = vand.u32 %v2495, 4294901760
    %2497 = vmatpush1.msra.mxu0 %v2496
    %2498 = vmatprep.subr.mxu0 0.0
    %v2499 = vand.u32 %v88, 4294901760
    %v2500 = vsub.f32 %v88, %v2499
    %v2501 = vand.u32 %v2500, 4294901760
    %2502 = vmatpush1.msra.mxu0 %v2501
    %2503 = vmatprep.subr.mxu0 0.0
    %v2504 = vand.u32 %v87, 4294901760
    %v2505 = vsub.f32 %v87, %v2504
    %v2506 = vand.u32 %v2505, 4294901760
    %2507 = vmatpush1.msra.mxu0 %v2506
    %2508 = vmatprep.subr.mxu0 0.0
    %v2509 = vand.u32 %v86, 4294901760
    %v2510 = vsub.f32 %v86, %v2509
    %v2511 = vand.u32 %v2510, 4294901760
    %2512 = vmatpush1.msra.mxu0 %v2511
    %2513 = vmatprep.subr.mxu0 0.0
    %v2514 = vand.u32 %v85, 4294901760
    %v2515 = vsub.f32 %v85, %v2514
    %v2516 = vand.u32 %v2515, 4294901760
    %2517 = vmatpush1.msra.mxu0 %v2516
    %2518 = vmatprep.subr.mxu0 0.0
    %v2519 = vand.u32 %v84, 4294901760
    %v2520 = vsub.f32 %v84, %v2519
    %v2521 = vand.u32 %v2520, 4294901760
    %2522 = vmatpush1.msra.mxu0 %v2521
    %2523 = vmatprep.subr.mxu0 0.0
    %v2524 = vand.u32 %v83, 4294901760
    %v2525 = vsub.f32 %v83, %v2524
    %v2526 = vand.u32 %v2525, 4294901760
    %2527 = vmatpush1.msra.mxu0 %v2526
    %2528 = vmatprep.subr.mxu0 0.0
    %v2529 = vand.u32 %v82, 4294901760
    %v2530 = vsub.f32 %v82, %v2529
    %v2531 = vand.u32 %v2530, 4294901760
    %2532 = vmatpush1.msra.mxu0 %v2531
    %2533 = vmatprep.subr.mxu0 0.0
    %v2534 = vand.u32 %v81, 4294901760
    %v2535 = vsub.f32 %v81, %v2534
    %v2536 = vand.u32 %v2535, 4294901760
    %2537 = vmatpush1.msra.mxu0 %v2536
    %2538 = vmatprep.subr.mxu0 0.0
    %v2539 = vand.u32 %v80, 4294901760
    %v2540 = vsub.f32 %v80, %v2539
    %v2541 = vand.u32 %v2540, 4294901760
    %2542 = vmatpush1.msra.mxu0 %v2541
    %2543 = vmatprep.subr.mxu0 0.0
    %v2544 = vand.u32 %v79, 4294901760
    %v2545 = vsub.f32 %v79, %v2544
    %v2546 = vand.u32 %v2545, 4294901760
    %2547 = vmatpush1.msra.mxu0 %v2546
    %2548 = vmatprep.subr.mxu0 0.0
    %2549 = vmatpush2.msra.mxu0 0.0
    %2550 = vmatprep.subr.mxu0 0.0
    %2551 = vmatpush2.msra.mxu0 0.0
    %2552 = vmatprep.subr.mxu0 0.0
    %2553 = vmatpush2.msra.mxu0 0.0
    %2554 = vmatprep.subr.mxu0 0.0
    %2555 = vmatpush2.msra.mxu0 0.0
    %2556 = vmatprep.subr.mxu0 0.0
    %2557 = vmatpush2.msra.mxu0 0.0
    %2558 = vmatprep.subr.mxu0 0.0
    %2559 = vmatpush2.msra.mxu0 0.0
    %2560 = vmatprep.subr.mxu0 0.0
    %2561 = vmatpush2.msra.mxu0 0.0
    %2562 = vmatprep.subr.mxu0 0.0
    %2563 = vmatpush2.msra.mxu0 0.0
    %2564 = vmatprep.subr.mxu0 0.0
    %2565 = vmatpush2.msra.mxu0 0.0
    %2566 = vmatprep.subr.mxu0 0.0
    %2567 = vmatpush2.msra.mxu0 0.0
    %2568 = vmatprep.subr.mxu0 0.0
    %2569 = vmatpush2.msra.mxu0 0.0
    %2570 = vmatprep.subr.mxu0 0.0
    %2571 = vmatpush2.msra.mxu0 0.0
    %2572 = vmatprep.subr.mxu0 0.0
    %2573 = vmatpush2.msra.mxu0 0.0
    %2574 = vmatprep.subr.mxu0 0.0
    %2575 = vmatpush2.msra.mxu0 0.0
    %2576 = vmatprep.subr.mxu0 0.0
    %2577 = vmatpush2.msra.mxu0 0.0
    %2578 = vmatprep.subr.mxu0 0.0
    %2579 = vmatpush2.msra.mxu0 0.0
    %2580 = vmatprep.mubr.f32.mxu0 0.0
    %v2581 = vand.u32 %v2032, 4294901760
    %2582 = vmatmul.mubr.f32.gmra.mxu0 %v2581
    %v2583 = vpop.f32.mrf.mxu0
    %v2584 = vadd.f32 %v2465, %v2583
    %v2585 = vpop.f32.mrf.mxu0
    %2586 = vdwg.mxu0
    %2587 = vmatprep.subr.mxu0 0.0
    %v2588 = vand.u32 %v94, 4294901760
    %2589 = vmatpush1.msra.mxu0 %v2588
    %2590 = vmatprep.subr.mxu0 0.0
    %v2591 = vand.u32 %v93, 4294901760
    %2592 = vmatpush1.msra.mxu0 %v2591
    %2593 = vmatprep.subr.mxu0 0.0
    %v2594 = vand.u32 %v92, 4294901760
    %2595 = vmatpush1.msra.mxu0 %v2594
    %2596 = vmatprep.subr.mxu0 0.0
    %v2597 = vand.u32 %v91, 4294901760
    %2598 = vmatpush1.msra.mxu0 %v2597
    %2599 = vmatprep.subr.mxu0 0.0
    %v2600 = vand.u32 %v90, 4294901760
    %2601 = vmatpush1.msra.mxu0 %v2600
    %2602 = vmatprep.subr.mxu0 0.0
    %v2603 = vand.u32 %v89, 4294901760
    %2604 = vmatpush1.msra.mxu0 %v2603
    %2605 = vmatprep.subr.mxu0 0.0
    %v2606 = vand.u32 %v88, 4294901760
    %2607 = vmatpush1.msra.mxu0 %v2606
    %2608 = vmatprep.subr.mxu0 0.0
    %v2609 = vand.u32 %v87, 4294901760
    %2610 = vmatpush1.msra.mxu0 %v2609
    %2611 = vmatprep.subr.mxu0 0.0
    %v2612 = vand.u32 %v86, 4294901760
    %2613 = vmatpush1.msra.mxu0 %v2612
    %2614 = vmatprep.subr.mxu0 0.0
    %v2615 = vand.u32 %v85, 4294901760
    %2616 = vmatpush1.msra.mxu0 %v2615
    %2617 = vmatprep.subr.mxu0 0.0
    %v2618 = vand.u32 %v84, 4294901760
    %2619 = vmatpush1.msra.mxu0 %v2618
    %2620 = vmatprep.subr.mxu0 0.0
    %v2621 = vand.u32 %v83, 4294901760
    %2622 = vmatpush1.msra.mxu0 %v2621
    %2623 = vmatprep.subr.mxu0 0.0
    %v2624 = vand.u32 %v82, 4294901760
    %2625 = vmatpush1.msra.mxu0 %v2624
    %2626 = vmatprep.subr.mxu0 0.0
    %v2627 = vand.u32 %v81, 4294901760
    %2628 = vmatpush1.msra.mxu0 %v2627
    %2629 = vmatprep.subr.mxu0 0.0
    %v2630 = vand.u32 %v80, 4294901760
    %2631 = vmatpush1.msra.mxu0 %v2630
    %2632 = vmatprep.subr.mxu0 0.0
    %v2633 = vand.u32 %v79, 4294901760
    %2634 = vmatpush1.msra.mxu0 %v2633
    %2635 = vmatprep.subr.mxu0 0.0
    %2636 = vmatpush2.msra.mxu0 0.0
    %2637 = vmatprep.subr.mxu0 0.0
    %2638 = vmatpush2.msra.mxu0 0.0
    %2639 = vmatprep.subr.mxu0 0.0
    %2640 = vmatpush2.msra.mxu0 0.0
    %2641 = vmatprep.subr.mxu0 0.0
    %2642 = vmatpush2.msra.mxu0 0.0
    %2643 = vmatprep.subr.mxu0 0.0
    %2644 = vmatpush2.msra.mxu0 0.0
    %2645 = vmatprep.subr.mxu0 0.0
    %2646 = vmatpush2.msra.mxu0 0.0
    %2647 = vmatprep.subr.mxu0 0.0
    %2648 = vmatpush2.msra.mxu0 0.0
    %2649 = vmatprep.subr.mxu0 0.0
    %2650 = vmatpush2.msra.mxu0 0.0
    %2651 = vmatprep.subr.mxu0 0.0
    %2652 = vmatpush2.msra.mxu0 0.0
    %2653 = vmatprep.subr.mxu0 0.0
    %2654 = vmatpush2.msra.mxu0 0.0
    %2655 = vmatprep.subr.mxu0 0.0
    %2656 = vmatpush2.msra.mxu0 0.0
    %2657 = vmatprep.subr.mxu0 0.0
    %2658 = vmatpush2.msra.mxu0 0.0
    %2659 = vmatprep.subr.mxu0 0.0
    %2660 = vmatpush2.msra.mxu0 0.0
    %2661 = vmatprep.subr.mxu0 0.0
    %2662 = vmatpush2.msra.mxu0 0.0
    %2663 = vmatprep.subr.mxu0 0.0
    %2664 = vmatpush2.msra.mxu0 0.0
    %2665 = vmatprep.subr.mxu0 0.0
    %2666 = vmatpush2.msra.mxu0 0.0
    %2667 = vmatprep.mubr.f32.mxu0 0.0
    %v2668 = vand.u32 %v2032, 4294901760
    %2669 = vmatmul.mubr.f32.gmra.mxu0 %v2668
    %v2670 = vpop.f32.mrf.mxu0
    %v2671 = vadd.f32 %v2584, %v2670
    %v2672 = vpop.f32.mrf.mxu0
    %2673 = vdwg.mxu0
    %v2674 = vld [vmem:[%s1] sm:$0x1]
    %v2675 = vld [vmem:[%s2] sm:$0x1]
    %v2676 = vmul.f32 %v1378, %v2671
    %v2678 = vlaneseq
    %v2679 = vshrl.u32 %v2678, 7
    %v2680 = vsub.s32 0, %v2679
    %v2681 = vrot.slane %v2674, %v2680
    %v2683 = vmul.f32 %v2681, %v2676
    %v2685 = vlaneseq
    %v2686 = vshrl.u32 %v2685, 7
    %v2687 = vsub.s32 0, %v2686
    %v2688 = vrot.slane %v2675, %v2687
    %v2690 = vadd.f32 %v2683, %v2688
    %2691 = vst [vmem:[#allocation8] sm:$0xff] %v2690
    // Predicated region
    $region34: #{tpu_custom_call.1} parent=1 // pred_check
      _
    $region35: #{tpu_custom_call.1} parent=1 // pred_check_branch
      %2693 = sbr.rel (0) target = $region37
    $region36: #{tpu_custom_call.1} parent=1 // pred_region
      %s2695 = ssub.s32 128, 32
      %2696 = vsyncadd [#allocation4], %s2695
      %s2697 = sshll.u32 [#allocation8], 4
      %s2698 = int_to_ptr.vmem [resolvable:$true] %s2697
      %2703 = dma.vmem_to_hbm [thread:$0]  %s2698, 32, %s5, [#allocation4], 32, 32, 2
    $region37: #{tpu_custom_call.1} parent=1 // pred_fallthru
      _
    // Predicated region
    $region38: #{tpu_custom_call.1} parent=1 // pred_check
      _
    $region39: #{tpu_custom_call.1} parent=1 // pred_check_branch
      %2705 = sbr.rel (0) target = $region41
    $region40: #{tpu_custom_call.1} parent=1 // pred_region
      %2706 = dma.done [#allocation4], 128
    $region41: #{tpu_custom_call.1} parent=1 // pred_fallthru
      _
    %2707 = vsyncpa [#allocation3], 1
    %2708 = vsyncpa [#allocation6], 1
    %2709 = vsyncpa [#allocation4], 1

</llo_original>
